<compile_context>
chip_gen: v7x
topology: tpu7x:2x2x1
jax: 0.10.0
libtpu: 0.0.40
codegen_flags: <defaults>
</compile_context>

<pallas_src>
import functools
import math

import jax
import jax.numpy as jnp
from jax.experimental import pallas as pl
from jax.experimental.pallas import tpu as pltpu

MIN_SIZE = 1.0          # self.min_size = 1.0 in the reference module
SCORE_THRESH = 0.0      # torchvision default (dead check with sigmoid, kept for fidelity)
NMS_THRESH = 0.7
PRE_NMS_TOP_N = 64
POST_NMS_TOP_N = 16
BBOX_XFORM_CLIP = math.log(1000.0 / 16.0)
LANE = 128

ANCHOR_SCALES = (32.0,)
ANCHOR_RATIOS = (0.5, 1.0, 2.0)


def _round_up(x, m):
    return -(-x // m) * m


# ----------------------------------------------------------------------------
# Pallas kernel 1: RPNHead  (3x3 conv as 3 ky-tap matmuls + ReLU + fused 1x1)
# ----------------------------------------------------------------------------
def rpn_head_kernel(x_ref, w3_ref, bmid_ref, wout_ref, bout_ref, out_ref):
    # x_ref   : [1, 1, TH+2, W, Ck]  bf16  (kx taps packed into Ck lanes)
    # w3_ref  : [3, Ck, Cmid]        bf16  (one weight slab per ky tap)
    # out_ref : [1, TH, W, Cout]     f32   (Cout = 128-lane padded cls|bbox)
    TH = out_ref.shape[1]
    W = out_ref.shape[2]
    Ck = x_ref.shape[-1]
    Cout = out_ref.shape[-1]

    # 3x3 conv == 3 ky taps; each tap is one lane-dense [TH*W, Ck] x [Ck, Cmid]
    # matmul.  Leading-axis slices (and W%8==0 reshapes) are layout no-ops, so
    # there are no per-tap VMEM relayouts.  Accumulator stays in registers.
    acc = jnp.dot(x_ref[0, 0, 0:TH].reshape(TH * W, Ck), w3_ref[0],
                  preferred_element_type=jnp.float32)
    acc = acc + jnp.dot(x_ref[0, 0, 1:TH + 1].reshape(TH * W, Ck), w3_ref[1],
                        preferred_element_type=jnp.float32)
    acc = acc + jnp.dot(x_ref[0, 0, 2:TH + 2].reshape(TH * W, Ck), w3_ref[2],
                        preferred_element_type=jnp.float32)
    t = jnp.maximum(acc + bmid_ref[...], 0.0).astype(jnp.bfloat16)     # bias + ReLU
    res = jnp.dot(t, wout_ref[...],                                    # fused cls|bbox 1x1
                  preferred_element_type=jnp.float32) + bout_ref[...]
    out_ref[...] = res.reshape(1, TH, W, Cout)                         # lane-dense store


def _pick_tile_h(H, W):
    # Fill the MXU M dimension (TH*W >= 256) while keeping strips small.
    th = max(8, -(-256 // max(W, 1)))
    return min(th, H)


def rpn_head(x_nhwc, packed, tile_h=None):
    N, H, W, C = x_nhwc.shape
    w3, bmid = packed["w3"], packed["b_mid"]
    wout, bout = packed["w_out"], packed["b_out"]
    A = packed["A"]
    Ck, Cmid = w3.shape[1], w3.shape[2]
    Cout = wout.shape[1]

    TH = tile_h if tile_h is not None else _pick_tile_h(H, W)
    n_strips = -(-H // TH)
    Hp = n_strips * TH

    # Wrapper-side layout pass (one fused XLA pass over the feature map):
    #   * 1-px spatial halo, rows padded to Hp, cast to bf16,
    #   * kx taps packed into channel lanes (Ck = pad(3C, 128)) -> the kernel
    #     needs only free leading-axis ky slices,
    #   * overlapping (TH+2)-row halo strips so BlockSpec auto-pipelines them.
    # For C <= 42 the kx packing costs the same DMA bytes as the old C->128 pad.
    # TODO(synk): for C >= 128 heads, switch to per-tap pltpu.roll shifts and/or
    # absorb this pad pass into a manual halo strip DMA to avoid the 3x bytes.
    xp = jnp.pad(x_nhwc.astype(jnp.bfloat16),
                 ((0, 0), (1, 1 + Hp - H), (1, 1), (0, 0)))        # [N,Hp+2,W+2,C]
    xk = jnp.concatenate([xp[:, :, kx:kx + W, :] for kx in range(3)], axis=-1)
    xk = jnp.pad(xk, ((0, 0), (0, 0), (0, 0), (0, Ck - 3 * C)))    # [N,Hp+2,W,Ck]
    xs = jnp.stack([xk[:, s * TH:s * TH + TH + 2] for s in range(n_strips)],
                   axis=1)                                         # [N,S,TH+2,W,Ck]

    out = pl.pallas_call(
        rpn_head_kernel,
        out_shape=jax.ShapeDtypeStruct((N, Hp, W, Cout), jnp.float32),
        grid_spec=pltpu.PrefetchScalarGridSpec(
            num_scalar_prefetch=0,
            grid=(N, n_strips),
            in_specs=[
                pl.BlockSpec((1, 1, TH + 2, W, Ck), lambda n, s: (n, s, 0, 0, 0)),
                pl.BlockSpec((3, Ck, Cmid), lambda n, s: (0, 0, 0)),   # conv taps (bf16)
                pl.BlockSpec((1, Cmid), lambda n, s: (0, 0)),          # conv bias (f32)
                pl.BlockSpec((Cmid, Cout), lambda n, s: (0, 0)),       # fused 1x1 (bf16)
                pl.BlockSpec((1, Cout), lambda n, s: (0, 0)),          # fused bias (f32)
            ],
            out_specs=pl.BlockSpec((1, TH, W, Cout), lambda n, s: (n, s, 0, 0)),
        ),
        compiler_params=pltpu.CompilerParams(
            dimension_semantics=("parallel", "parallel"),   # batch & strips shardable
        ),
    )(xs, w3, bmid, wout, bout)

    out = out[:, :H]                          # drop padded rows
    return out[..., :A], out[..., A:5 * A]    # objectness [N,H,W,A], deltas [N,H,W,4A]


# ----------------------------------------------------------------------------
# Pallas kernel 2: box decode + clip + sigmoid + validity mask (planar tiles)
# ----------------------------------------------------------------------------
def decode_kernel(img_hw_ref, d_ref, a_ref, lg_ref, boxes_ref, probs_ref):
    # d_ref/a_ref: [4, rows, 128] coordinate-planar tiles; lg_ref: [rows, 128]
    img_h = img_hw_ref[0].astype(jnp.float32)
    img_w = img_hw_ref[1].astype(jnp.float32)
    ax1, ay1, ax2, ay2 = a_ref[0], a_ref[1], a_ref[2], a_ref[3]
    w_a = ax2 - ax1
    h_a = ay2 - ay1
    cx = ax1 + 0.5 * w_a
    cy = ay1 + 0.5 * h_a
    dx = d_ref[0]
    dy = d_ref[1]
    dw = jnp.minimum(d_ref[2], BBOX_XFORM_CLIP)
    dh = jnp.minimum(d_ref[3], BBOX_XFORM_CLIP)
    pcx = dx * w_a + cx
    pcy = dy * h_a + cy
    pw = jnp.exp(dw) * w_a
    ph = jnp.exp(dh) * h_a
    x1 = jnp.clip(pcx - 0.5 * pw, 0.0, img_w)
    y1 = jnp.clip(pcy - 0.5 * ph, 0.0, img_h)
    x2 = jnp.clip(pcx + 0.5 * pw, 0.0, img_w)
    y2 = jnp.clip(pcy + 0.5 * ph, 0.0, img_h)
    boxes_ref[0] = x1
    boxes_ref[1] = y1
    boxes_ref[2] = x2
    boxes_ref[3] = y2
    # sigmoid via EUP approx reciprocal (divide off the VPU)
    p = pl.reciprocal(1.0 + jnp.exp(-lg_ref[...]), approx=True)
    ok = (x2 - x1 >= MIN_SIZE) & (y2 - y1 >= MIN_SIZE) & (p >= SCORE_THRESH)
    probs_ref[...] = jnp.where(ok, p, -1.0)   # keep mask folded into the prob plane


def decode_and_mask(deltas, anchors, logits, img_hw, block_rows=None):
    K = deltas.shape[0]
    rows_needed = -(-K // LANE)
    if block_rows is None:
        # Large blocks (>=2K anchors / ~1 MiB per operand) so per-step pipeline
        # overhead is amortized; capped to avoid gross padding at small K.
        block_rows = min(64, max(8, _round_up(rows_needed, 8)))
    kb = LANE * block_rows
    Kp = _round_up(K, kb)
    pad = Kp - K
    R = Kp // LANE
    # TODO(synk): emit coordinate-planar deltas/logits straight from the head
    # kernel to drop these XLA transposes once anchor counts reach 1e5-1e6.
    d4 = jnp.pad(deltas, ((0, pad), (0, 0))).T.reshape(4, R, LANE)
    a4 = jnp.pad(anchors, ((0, pad), (0, 0))).T.reshape(4, R, LANE)
    lg = jnp.pad(logits, (0, pad)).reshape(R, LANE)

    boxes4, probs = pl.pallas_call(
        decode_kernel,
        out_shape=(jax.ShapeDtypeStruct((4, R, LANE), jnp.float32),
                   jax.ShapeDtypeStruct((R, LANE), jnp.float32)),
        grid_spec=pltpu.PrefetchScalarGridSpec(
            num_scalar_prefetch=1,                     # img_hw -> SMEM
            grid=(R // block_rows,),
            in_specs=[
                pl.BlockSpec((4, block_rows, LANE), lambda i, hw: (0, i, 0)),
                pl.BlockSpec((4, block_rows, LANE), lambda i, hw: (0, i, 0)),
                pl.BlockSpec((block_rows, LANE), lambda i, hw: (i, 0)),
            ],
            out_specs=(
                pl.BlockSpec((4, block_rows, LANE), lambda i, hw: (0, i, 0)),
                pl.BlockSpec((block_rows, LANE), lambda i, hw: (i, 0)),
            ),
        ),
        compiler_params=pltpu.CompilerParams(dimension_semantics=("parallel",)),
    )(img_hw, d4, a4, lg)

    boxes = boxes4.reshape(4, Kp).T[:K]
    return boxes, probs.reshape(Kp)[:K]      # masked probs: invalid boxes -> -1


# ----------------------------------------------------------------------------
# Plain-JAX glue: anchors, per-image top-k, greedy NMS (fixed-size / padded)
# ----------------------------------------------------------------------------
def generate_base_anchors(scales, aspect_ratios):
    scales = jnp.asarray(scales, jnp.float32)
    ratios = jnp.asarray(aspect_ratios, jnp.float32)
    h_ratios = jnp.sqrt(ratios)
    w_ratios = 1.0 / h_ratios
    ws = (w_ratios[:, None] * scales[None, :]).reshape(-1)
    hs = (h_ratios[:, None] * scales[None, :]).reshape(-1)
    return jnp.stack([-ws, -hs, ws, hs], axis=1) / 2.0            # [A, 4]


def grid_anchors(base, H, W, stride_h, stride_w):
    sx = jnp.arange(W, dtype=jnp.float32) * stride_w
    sy = jnp.arange(H, dtype=jnp.float32) * stride_h
    shift_y, shift_x = jnp.meshgrid(sy, sx, indexing="ij")
    shifts = jnp.stack([shift_x.ravel(), shift_y.ravel(),
                        shift_x.ravel(), shift_y.ravel()], axis=1)
    return (shifts[:, None, :] + base[None, :, :]).reshape(-1, 4)  # [H*W*A, 4]


def box_iou_jax(b1, b2):
    area1 = (b1[:, 2] - b1[:, 0]) * (b1[:, 3] - b1[:, 1])
    area2 = (b2[:, 2] - b2[:, 0]) * (b2[:, 3] - b2[:, 1])
    lt = jnp.maximum(b1[:, None, :2], b2[None, :, :2])
    rb = jnp.minimum(b1[:, None, 2:], b2[None, :, 2:])
    wh = jnp.clip(rb - lt, 0.0)
    inter = wh[..., 0] * wh[..., 1]
    return inter / (area1[:, None] + area2[None, :] - inter)


def greedy_nms(boxes, valid, iou_thresh):
    # TODO(synk): dynamic-shape torchvision NMS has no Pallas equivalent;
    # implemented as fixed-size greedy suppression in plain JAX.
    n = boxes.shape[0]
    iou = box_iou_jax(boxes, boxes)
    idx = jnp.arange(n)

    def body(i, keep):
        earlier = keep & (idx < i)
        suppressed = jnp.any(earlier & (iou[i] > iou_thresh))
        keep_i = valid[i] & jnp.logical_not(suppressed)
        return keep.at[i].set(keep_i)

    return jax.lax.fori_loop(0, n, body, jnp.zeros((n,), bool))


def _filter_single_image(logits, proposals, masked_probs, pre_n, post_n):
    _, top_idx = jax.lax.top_k(logits, pre_n)           # top-k on raw objectness
    b = proposals[top_idx]
    mp = masked_probs[top_idx]                           # -1 marks small/low-score boxes
    v = mp >= 0.0
    nms_keep = greedy_nms(b, v, NMS_THRESH)
    masked = jnp.where(nms_keep, mp, -1.0)               # -1 marks suppressed/padding
    sel_scores, sel = jax.lax.top_k(masked, post_n)
    sel_boxes = jnp.where(sel_scores[:, None] > -0.5, b[sel], 0.0)  # zero padded boxes
    return sel_boxes, sel_scores


def filter_proposals(proposals, masked_probs, logits, num_images):
    k_per = proposals.shape[0] // num_images
    pre_n = min(PRE_NMS_TOP_N, k_per)
    post_n = min(POST_NMS_TOP_N, pre_n)
    fn = functools.partial(_filter_single_image, pre_n=pre_n, post_n=post_n)
    fb, fs = jax.vmap(fn)(logits.reshape(num_images, k_per),
                          proposals.reshape(num_images, k_per, 4),
                          masked_probs.reshape(num_images, k_per))
    return [fb[i] for i in range(num_images)], [fs[i] for i in range(num_images)]


def rpn_forward(features_nchw, params, image_size):
    """features_nchw: [N, C, H, W] (PyTorch layout); image_size: (H_img, W_img)."""
    N, C, H, W = features_nchw.shape
    packed = pack_params(params)
    A = packed["A"]
    base = jnp.round(generate_base_anchors(ANCHOR_SCALES, ANCHOR_RATIOS))
    assert base.shape[0] == A, "anchor scales/ratios inconsistent with head params"

    x = jnp.transpose(features_nchw, (0, 2, 3, 1))       # NCHW -> NHWC
    cls, box = rpn_head(x, packed)                       # [N,H,W,A], [N,H,W,4A]

    # permute_and_flatten equivalent: element order is (n, h, w, a)
    logits = cls.reshape(-1)
    deltas = box.reshape(N, H, W, A, 4).reshape(-1, 4)

    anchors_one = grid_anchors(base, H, W,
                               image_size[0] / H, image_size[1] / W)
    anchors = jnp.tile(anchors_one, (N, 1))
    img_hw = jnp.asarray(image_size, jnp.int32)

    boxes, masked_probs = decode_and_mask(deltas, anchors, logits, img_hw)
    return filter_proposals(boxes, masked_probs, logits, N)


# ----------------------------------------------------------------------------
def make_params(key, C, A):
    k1, k2, k3 = jax.random.split(key, 3)
    return {
        "w_conv": 0.01 * jax.random.normal(k1, (3, 3, C, C), jnp.float32),
        "b_conv": jnp.zeros((C,), jnp.float32),
        "w_cls": 0.01 * jax.random.normal(k2, (C, A), jnp.float32),
        "b_cls": jnp.zeros((A,), jnp.float32),
        "w_box": 0.01 * jax.random.normal(k3, (C, 4 * A), jnp.float32),
        "b_box": jnp.zeros((4 * A,), jnp.float32),
    }


def pack_params(params):
    """Pack the 3 kx taps of the 3x3 conv into the contraction (lane) dim
    (Ck = pad(3C, 128)), pad mid/out channels to 128 lanes, fuse the cls|bbox
    1x1 convs into one lane-dense [Cmid, 128] weight, and cast matmul operands
    to bf16 (biases stay f32)."""
    C = params["w_conv"].shape[2]
    A = params["w_cls"].shape[1]
    Ck = max(LANE, _round_up(3 * C, LANE))
    Cmid = max(LANE, _round_up(C, LANE))
    Cout = max(LANE, _round_up(5 * A, LANE))            # A cls + 4A bbox, lane-padded
    w3 = jnp.zeros((3, Ck, Cmid), jnp.float32)
    for ky in range(3):
        for kx in range(3):
            w3 = w3.at[ky, kx * C:(kx + 1) * C, :C].set(params["w_conv"][ky, kx])
    bmid = jnp.zeros((1, Cmid), jnp.float32).at[0, :C].set(params["b_conv"])
    wout = jnp.zeros((Cmid, Cout), jnp.float32)
    wout = wout.at[:C, :A].set(params["w_cls"])
    wout = wout.at[:C, A:5 * A].set(params["w_box"])
    bout = jnp.zeros((1, Cout), jnp.float32)
    bout = bout.at[0, :5 * A].set(jnp.concatenate([params["b_cls"], params["b_box"]]))
    return {"w3": w3.astype(jnp.bfloat16), "b_mid": bmid,
            "w_out": wout.astype(jnp.bfloat16), "b_out": bout, "A": A}


if __name__ == "__main__":
    N, C, H, W = 2, 16, 16, 16
    A = len(ANCHOR_SCALES) * len(ANCHOR_RATIOS)          # 3
    image_size = (128, 128)

    key = jax.random.PRNGKey(0)
    k_feat, k_param = jax.random.split(key)
    features = jax.random.normal(k_feat, (N, C, H, W), jnp.float32)  # NCHW input
    params = make_params(k_param, C, A)

    final_boxes, final_scores = rpn_forward(features, params, image_size)
    jax.block_until_ready((final_boxes, final_scores))

    assert len(final_boxes) == N and len(final_scores) == N
    assert final_boxes[0].shape == (POST_NMS_TOP_N, 4)
    assert final_scores[0].shape == (POST_NMS_TOP_N,)
    print("KERNEL_OK")
</pallas_src>

<mosaic_0001>
module attributes {stable_mosaic.version = 11 : i64} {
  func.func @rpn_head_kernel(%arg0: i32, %arg1: i32, %arg2: memref<1x1x18x16x128xbf16, #tpu.memory_space<vmem>>, %arg3: memref<3x128x128xbf16, #tpu.memory_space<vmem>>, %arg4: memref<1x128xf32, #tpu.memory_space<vmem>>, %arg5: memref<128x128xbf16, #tpu.memory_space<vmem>>, %arg6: memref<1x128xf32, #tpu.memory_space<vmem>>, %arg7: memref<1x16x16x128xf32, #tpu.memory_space<vmem>>) attributes {dimension_semantics = [#tpu.dimension_semantics<parallel>, #tpu.dimension_semantics<parallel>], iteration_bounds = array<i64: 2, 1>, scalar_prefetch = 0 : i64, scratch_operands = 0 : i64, tpu.core_type = #tpu.core_type<tc>, window_params = [{transform_indices = @transform_0, window_bounds = array<i64: 1, 1, 18, 16, 128>}, {pipeline_mode = #tpu.pipeline_mode<synchronous>, transform_indices = @transform_1, window_bounds = array<i64: 3, 128, 128>}, {pipeline_mode = #tpu.pipeline_mode<synchronous>, transform_indices = @transform_2, window_bounds = array<i64: 1, 128>}, {pipeline_mode = #tpu.pipeline_mode<synchronous>, transform_indices = @transform_3, window_bounds = array<i64: 128, 128>}, {pipeline_mode = #tpu.pipeline_mode<synchronous>, transform_indices = @transform_4, window_bounds = array<i64: 1, 128>}, {transform_indices = @transform_5, window_bounds = array<i64: 1, 16, 16, 128>}]} {
    %c0 = arith.constant 0 : index
    %c0_0 = arith.constant 0 : index
    %c0_1 = arith.constant 0 : index
    %c0_2 = arith.constant 0 : index
    %c0_3 = arith.constant 0 : index
    %0 = vector.load %arg2[%c0, %c0_0, %c0_1, %c0_2, %c0_3] : memref<1x1x18x16x128xbf16, #tpu.memory_space<vmem>>, vector<1x1x16x16x128xbf16>
    %1 = vector.shape_cast %0 : vector<1x1x16x16x128xbf16> to vector<16x16x128xbf16>
    %2 = vector.shape_cast %1 : vector<16x16x128xbf16> to vector<256x128xbf16>
    %c0_4 = arith.constant 0 : index
    %c0_5 = arith.constant 0 : index
    %c0_6 = arith.constant 0 : index
    %3 = vector.load %arg3[%c0_4, %c0_5, %c0_6] : memref<3x128x128xbf16, #tpu.memory_space<vmem>>, vector<1x128x128xbf16>
    %4 = vector.shape_cast %3 : vector<1x128x128xbf16> to vector<128x128xbf16>
    %cst = arith.constant dense<0.000000e+00> : vector<256x128xf32>
    %5 = tpu.matmul %2, %4, %cst {dimension_numbers = #tpu.dot_dimension_numbers<[1], [0], [0], [1], [0, 0, 1, 1], [], []>} : vector<256x128xbf16>, vector<128x128xbf16>, vector<256x128xf32> -> vector<256x128xf32>
    %c0_7 = arith.constant 0 : index
    %c0_8 = arith.constant 0 : index
    %c1 = arith.constant 1 : index
    %c0_9 = arith.constant 0 : index
    %c0_10 = arith.constant 0 : index
    %6 = vector.load %arg2[%c0_7, %c0_8, %c1, %c0_9, %c0_10] : memref<1x1x18x16x128xbf16, #tpu.memory_space<vmem>>, vector<1x1x16x16x128xbf16>
    %7 = vector.shape_cast %6 : vector<1x1x16x16x128xbf16> to vector<16x16x128xbf16>
    %8 = vector.shape_cast %7 : vector<16x16x128xbf16> to vector<256x128xbf16>
    %c1_11 = arith.constant 1 : index
    %c0_12 = arith.constant 0 : index
    %c0_13 = arith.constant 0 : index
    %9 = vector.load %arg3[%c1_11, %c0_12, %c0_13] : memref<3x128x128xbf16, #tpu.memory_space<vmem>>, vector<1x128x128xbf16>
    %10 = vector.shape_cast %9 : vector<1x128x128xbf16> to vector<128x128xbf16>
    %cst_14 = arith.constant dense<0.000000e+00> : vector<256x128xf32>
    %11 = tpu.matmul %8, %10, %cst_14 {dimension_numbers = #tpu.dot_dimension_numbers<[1], [0], [0], [1], [0, 0, 1, 1], [], []>} : vector<256x128xbf16>, vector<128x128xbf16>, vector<256x128xf32> -> vector<256x128xf32>
    %12 = arith.addf %5, %11 : vector<256x128xf32>
    %c0_15 = arith.constant 0 : index
    %c0_16 = arith.constant 0 : index
    %c2 = arith.constant 2 : index
    %c0_17 = arith.constant 0 : index
    %c0_18 = arith.constant 0 : index
    %13 = vector.load %arg2[%c0_15, %c0_16, %c2, %c0_17, %c0_18] : memref<1x1x18x16x128xbf16, #tpu.memory_space<vmem>>, vector<1x1x16x16x128xbf16>
    %14 = vector.shape_cast %13 : vector<1x1x16x16x128xbf16> to vector<16x16x128xbf16>
    %15 = vector.shape_cast %14 : vector<16x16x128xbf16> to vector<256x128xbf16>
    %c2_19 = arith.constant 2 : index
    %c0_20 = arith.constant 0 : index
    %c0_21 = arith.constant 0 : index
    %16 = vector.load %arg3[%c2_19, %c0_20, %c0_21] : memref<3x128x128xbf16, #tpu.memory_space<vmem>>, vector<1x128x128xbf16>
    %17 = vector.shape_cast %16 : vector<1x128x128xbf16> to vector<128x128xbf16>
    %cst_22 = arith.constant dense<0.000000e+00> : vector<256x128xf32>
    %18 = tpu.matmul %15, %17, %cst_22 {dimension_numbers = #tpu.dot_dimension_numbers<[1], [0], [0], [1], [0, 0, 1, 1], [], []>} : vector<256x128xbf16>, vector<128x128xbf16>, vector<256x128xf32> -> vector<256x128xf32>
    %19 = arith.addf %12, %18 : vector<256x128xf32>
    %c0_23 = arith.constant 0 : index
    %c0_24 = arith.constant 0 : index
    %20 = vector.load %arg4[%c0_23, %c0_24] : memref<1x128xf32, #tpu.memory_space<vmem>>, vector<1x128xf32>
    %21 = vector.broadcast %20 : vector<1x128xf32> to vector<256x128xf32>
    %22 = arith.addf %19, %21 : vector<256x128xf32>
    %cst_25 = arith.constant 0.000000e+00 : f32
    %23 = vector.broadcast %cst_25 : f32 to vector<256x128xf32>
    %24 = arith.maximumf %22, %23 : vector<256x128xf32>
    %25 = arith.truncf %24 : vector<256x128xf32> to vector<256x128xbf16>
    %c0_26 = arith.constant 0 : index
    %c0_27 = arith.constant 0 : index
    %26 = vector.load %arg5[%c0_26, %c0_27] : memref<128x128xbf16, #tpu.memory_space<vmem>>, vector<128x128xbf16>
    %cst_28 = arith.constant dense<0.000000e+00> : vector<256x128xf32>
    %27 = tpu.matmul %25, %26, %cst_28 {dimension_numbers = #tpu.dot_dimension_numbers<[1], [0], [0], [1], [0, 0, 1, 1], [], []>} : vector<256x128xbf16>, vector<128x128xbf16>, vector<256x128xf32> -> vector<256x128xf32>
    %c0_29 = arith.constant 0 : index
    %c0_30 = arith.constant 0 : index
    %28 = vector.load %arg6[%c0_29, %c0_30] : memref<1x128xf32, #tpu.memory_space<vmem>>, vector<1x128xf32>
    %29 = vector.broadcast %28 : vector<1x128xf32> to vector<256x128xf32>
    %30 = arith.addf %27, %29 : vector<256x128xf32>
    %31 = vector.shape_cast %30 : vector<256x128xf32> to vector<1x16x16x128xf32>
    %c0_31 = arith.constant 0 : index
    %c0_32 = arith.constant 0 : index
    %c0_33 = arith.constant 0 : index
    %c0_34 = arith.constant 0 : index
    %32 = vector.load %arg7[%c0_31, %c0_32, %c0_33, %c0_34] : memref<1x16x16x128xf32, #tpu.memory_space<vmem>>, vector<1x16x16x128xf32>
    tpu.vector_store %arg7[%c0_31, %c0_32, %c0_33, %c0_34], %31 {strides = array<i32>} : memref<1x16x16x128xf32, #tpu.memory_space<vmem>>, vector<1x16x16x128xf32>,
    return
  }
  func.func @transform_0(%arg0: i32, %arg1: i32) -> (i32, i32, i32, i32, i32) {
    %c0_i32 = arith.constant 0 : i32
    %c0_i32_0 = arith.constant 0 : i32
    %c0_i32_1 = arith.constant 0 : i32
    %c0_i32_2 = arith.constant 0 : i32
    return %arg0, %arg1, %c0_i32, %c0_i32_0, %c0_i32_1 : i32, i32, i32, i32, i32
  }
  func.func @transform_1(%arg0: i32, %arg1: i32) -> (i32, i32, i32) {
    %c0_i32 = arith.constant 0 : i32
    %c0_i32_0 = arith.constant 0 : i32
    %c0_i32_1 = arith.constant 0 : i32
    %c0_i32_2 = arith.constant 0 : i32
    return %c0_i32, %c0_i32_0, %c0_i32_1 : i32, i32, i32
  }
  func.func @transform_2(%arg0: i32, %arg1: i32) -> (i32, i32) {
    %c0_i32 = arith.constant 0 : i32
    %c0_i32_0 = arith.constant 0 : i32
    %c0_i32_1 = arith.constant 0 : i32
    return %c0_i32, %c0_i32_0 : i32, i32
  }
  func.func @transform_3(%arg0: i32, %arg1: i32) -> (i32, i32) {
    %c0_i32 = arith.constant 0 : i32
    %c0_i32_0 = arith.constant 0 : i32
    %c0_i32_1 = arith.constant 0 : i32
    return %c0_i32, %c0_i32_0 : i32, i32
  }
  func.func @transform_4(%arg0: i32, %arg1: i32) -> (i32, i32) {
    %c0_i32 = arith.constant 0 : i32
    %c0_i32_0 = arith.constant 0 : i32
    %c0_i32_1 = arith.constant 0 : i32
    return %c0_i32, %c0_i32_0 : i32, i32
  }
  func.func @transform_5(%arg0: i32, %arg1: i32) -> (i32, i32, i32, i32) {
    %c0_i32 = arith.constant 0 : i32
    %c0_i32_0 = arith.constant 0 : i32
    %c0_i32_1 = arith.constant 0 : i32
    return %arg0, %arg1, %c0_i32, %c0_i32_0 : i32, i32, i32, i32
  }
}

</mosaic_0001>

<llo_original>
// kernel: tpu_custom_call.1
$region0: #{tpu_custom_call.1}
  #allocation0 [shape = 'u32[]', space=smem, size = 0x4, offset = 0x4, fixed_abs, tag = 'smem constant byte address 0x4 - core index']
  #allocation1 [shape = 'u32[144,128]{1,0:T(1,128)}', space=vmem, size = 0x12000, scoped, tag = 'internal scratch']
  %s0 = inlined_call_operand.hbm [shape: bf16[2,1,18,16,128], index: 0, kind: input, shape index: {}]
  %s1 = inlined_call_operand.hbm [shape: bf16[3,128,128], index: 1, kind: input, shape index: {}]
  %s2 = inlined_call_operand.vmem [shape: f32[1,128], index: 2, kind: input, shape index: {}]
  %s3 = inlined_call_operand.hbm [shape: bf16[128,128], index: 3, kind: input, shape index: {}]
  %s4 = inlined_call_operand.vmem [shape: f32[1,128], index: 4, kind: input, shape index: {}]
  %s5 = inlined_call_operand.hbm [shape: f32[2,16,16,128], index: 5, kind: output, shape index: {}]
  %s6 = sld [smem:[#allocation0]]
  $region65: #{tpu_custom_call.1} parent=0
    _
  %s8 = ssub.s32 1, %s6
  %s9 = scalar_select 0, %s8, %s6
  $region1: #{tpu_custom_call.1} parent=0
    #allocation2 [shape = 'u8[147456]{0}', space=vmem, size = 0x24000, scoped, tag = 'input window, operand 0']
    #allocation3 [shape = 's32[2]{0}', space=sflag, size = 0x8, scoped, tag = 'scoped memory for tpu_custom_call.1']
    #allocation4 [shape = 's32[2]{0}', space=sflag, size = 0x8, scoped, tag = 'scoped memory for tpu_custom_call.1']
    #allocation5 [shape = 'u8[98304]{0}', space=vmem, size = 0x18000, scoped, tag = 'input window, operand 1, single buffered']
    #allocation6 [shape = 's32[1]{0}', space=sflag, size = 0x4, scoped, tag = 'scoped memory for tpu_custom_call.1']
    #allocation7 [shape = 'u8[32768]{0}', space=vmem, size = 0x8000, scoped, tag = 'input window, operand 3, single buffered']
    #allocation8 [shape = 'u8[262144]{0}', space=vmem, size = 0x40000, scoped, tag = 'output window, operand 0']
    %10 = vsyncpa [#allocation3], 0
    %s11 = scalar_lea.sflag [#allocation3], 1
    %12 = vsyncpa %s11, 0
    %13 = vsyncpa [#allocation6], 0
    %14 = vsyncpa [#allocation4], 0
    %s15 = scalar_lea.sflag [#allocation4], 1
    %16 = vsyncpa %s15, 0
    loop: start=0, step=1, limit=4
    $region2: #{tpu_custom_call.1} parent=1 // loop_pre_header
      _
    $region3: #{tpu_custom_call.1} parent=1 // loop_header
      %s18 = sphi 0, %s22
      %p19 = scmp.ge.s32.totalorder %s18, 4
      %s25 = sphi 0, %s37
      %s26 = sphi 0, %s33
      %s27 = sphi 0, %s25
      %s28 = sphi 0, %s26
      %s29 = sphi 0, %s27
      %s30 = sphi 0, %s28
      %s42 = sphi 0, %s44
      %s45 = sphi 0, %s42
      %s46 = sphi 0, %s45
      %s62 = sphi 0, %s46
      %s66 = sphi 0, %s66
      %s68 = sphi 0, %s66
      %s69 = sphi 0, %s68
      %s83 = sphi 0, %s69
      %s87 = sphi 0, %s87
      %s89 = sphi 0, %s87
      %s90 = sphi 0, %s89
      %s104 = sphi 0, %s90
      %s108 = sphi 0, %s108
      %s110 = sphi 0, %s108
      %s111 = sphi 0, %s110
      %s125 = sphi 0, %s111
      %s129 = sphi 0, %s129
      %s131 = sphi 0, %s129
      %s132 = sphi 0, %s131
      %s146 = sphi 0, %s132
      %s154 = sphi 0, %s156
      %s157 = sphi 0, %s154
      %s158 = sphi 0, %s157
      %s174 = sphi 0, %s158
    $region4: #{tpu_custom_call.1} parent=1 // loop_header_branch
      %21 = sbr.rel (%p19) target = $region8
    $region5: #{tpu_custom_call.1} parent=1 // loop_body
      %s23 = ssub.s32 %s18, 1
      %s24 = ssub.s32 %s18, 2
      %s31 = sadd.s32 1, %s26
      %p32 = scmp.ge.s32.totalorder %s31, 1
      %s33 = scalar_select %p32, 0, %s31
      %s34 = sadd.s32 1, %s25
      %s35 = scalar_select %p32, %s34, %s25
      %p36 = scmp.ge.s32.totalorder %s35, 2
      %s37 = scalar_select %p36, 0, %s35
      %s38 = ssub.s32 %s25, %s37
      %s39 = ssub.s32 %s26, %s33
      %s40 = sor.u32 %s38, %s39
      %p41 = scmp.eq.s32.totalorder %s40, 0
      %s43 = sadd.s32 %s42, 1
      %s44 = scalar_select %p41, %s42, %s43
      %p47 = pneg %p41
      %p48 = scmp.eq.s32.totalorder %s18, 1
      %p49 = por %p47, %p48
      %p50 = scmp.ne.s32.totalorder %s42, %s45
      %p51 = scmp.eq.s32.totalorder %s18, 0
      %p52 = por %p50, %p51
      %p53 = scmp.ne.s32.totalorder %s42, %s45
      %p54 = scmp.eq.s32.totalorder %s23, 1
      %p55 = por %p53, %p54
      %p56 = scmp.ne.s32.totalorder %s45, %s46
      %p57 = scmp.eq.s32.totalorder %s23, 0
      %p58 = por %p56, %p57
      %p59 = scmp.ne.s32.totalorder %s45, %s46
      %p60 = scmp.eq.s32.totalorder %s24, 1
      %p61 = por %p59, %p60
      %p63 = scmp.ne.s32.totalorder %s46, %s62
      %p64 = scmp.eq.s32.totalorder %s24, 0
      %p65 = por %p63, %p64
      %s67 = sadd.s32 %s66, 1
      %p70 = scmp.eq.s32.totalorder %s18, 1
      %p71 = scmp.ne.s32.totalorder %s66, %s68
      %p72 = scmp.eq.s32.totalorder %s18, 0
      %p73 = por %p71, %p72
      %p74 = scmp.ne.s32.totalorder %s66, %s68
      %p75 = scmp.eq.s32.totalorder %s23, 1
      %p76 = por %p74, %p75
      %p77 = scmp.ne.s32.totalorder %s68, %s69
      %p78 = scmp.eq.s32.totalorder %s23, 0
      %p79 = por %p77, %p78
      %p80 = scmp.ne.s32.totalorder %s68, %s69
      %p81 = scmp.eq.s32.totalorder %s24, 1
      %p82 = por %p80, %p81
      %p84 = scmp.ne.s32.totalorder %s69, %s83
      %p85 = scmp.eq.s32.totalorder %s24, 0
      %p86 = por %p84, %p85
      %s88 = sadd.s32 %s87, 1
      %p91 = scmp.eq.s32.totalorder %s18, 1
      %p92 = scmp.ne.s32.totalorder %s87, %s89
      %p93 = scmp.eq.s32.totalorder %s18, 0
      %p94 = por %p92, %p93
      %p95 = scmp.ne.s32.totalorder %s87, %s89
      %p96 = scmp.eq.s32.totalorder %s23, 1
      %p97 = por %p95, %p96
      %p98 = scmp.ne.s32.totalorder %s89, %s90
      %p99 = scmp.eq.s32.totalorder %s23, 0
      %p100 = por %p98, %p99
      %p101 = scmp.ne.s32.totalorder %s89, %s90
      %p102 = scmp.eq.s32.totalorder %s24, 1
      %p103 = por %p101, %p102
      %p105 = scmp.ne.s32.totalorder %s90, %s104
      %p106 = scmp.eq.s32.totalorder %s24, 0
      %p107 = por %p105, %p106
      %s109 = sadd.s32 %s108, 1
      %p112 = scmp.eq.s32.totalorder %s18, 1
      %p113 = scmp.ne.s32.totalorder %s108, %s110
      %p114 = scmp.eq.s32.totalorder %s18, 0
      %p115 = por %p113, %p114
      %p116 = scmp.ne.s32.totalorder %s108, %s110
      %p117 = scmp.eq.s32.totalorder %s23, 1
      %p118 = por %p116, %p117
      %p119 = scmp.ne.s32.totalorder %s110, %s111
      %p120 = scmp.eq.s32.totalorder %s23, 0
      %p121 = por %p119, %p120
      %p122 = scmp.ne.s32.totalorder %s110, %s111
      %p123 = scmp.eq.s32.totalorder %s24, 1
      %p124 = por %p122, %p123
      %p126 = scmp.ne.s32.totalorder %s111, %s125
      %p127 = scmp.eq.s32.totalorder %s24, 0
      %p128 = por %p126, %p127
      %s130 = sadd.s32 %s129, 1
      %p133 = scmp.eq.s32.totalorder %s18, 1
      %p134 = scmp.ne.s32.totalorder %s129, %s131
      %p135 = scmp.eq.s32.totalorder %s18, 0
      %p136 = por %p134, %p135
      %p137 = scmp.ne.s32.totalorder %s129, %s131
      %p138 = scmp.eq.s32.totalorder %s23, 1
      %p139 = por %p137, %p138
      %p140 = scmp.ne.s32.totalorder %s131, %s132
      %p141 = scmp.eq.s32.totalorder %s23, 0
      %p142 = por %p140, %p141
      %p143 = scmp.ne.s32.totalorder %s131, %s132
      %p144 = scmp.eq.s32.totalorder %s24, 1
      %p145 = por %p143, %p144
      %p147 = scmp.ne.s32.totalorder %s132, %s146
      %p148 = scmp.eq.s32.totalorder %s24, 0
      %p149 = por %p147, %p148
      %s150 = ssub.s32 %s25, %s37
      %s151 = ssub.s32 %s26, %s33
      %s152 = sor.u32 %s150, %s151
      %p153 = scmp.eq.s32.totalorder %s152, 0
      %s155 = sadd.s32 %s154, 1
      %s156 = scalar_select %p153, %s154, %s155
      %p159 = pneg %p153
      %p160 = scmp.eq.s32.totalorder %s18, 1
      %p161 = por %p159, %p160
      %p162 = scmp.ne.s32.totalorder %s154, %s157
      %p163 = scmp.eq.s32.totalorder %s18, 0
      %p164 = por %p162, %p163
      %p165 = scmp.ne.s32.totalorder %s154, %s157
      %p166 = scmp.eq.s32.totalorder %s23, 1
      %p167 = por %p165, %p166
      %p168 = scmp.ne.s32.totalorder %s157, %s158
      %p169 = scmp.eq.s32.totalorder %s23, 0
      %p170 = por %p168, %p169
      %p171 = scmp.ne.s32.totalorder %s157, %s158
      %p172 = scmp.eq.s32.totalorder %s24, 1
      %p173 = por %p171, %p172
      %p175 = scmp.ne.s32.totalorder %s158, %s174
      %p176 = scmp.eq.s32.totalorder %s24, 0
      %p177 = por %p175, %p176
      %p178 = scmp.le.s32.totalorder 1, %s18
      %p179 = scmp.lt.s32.totalorder %s18, 3
      %p180 = pnand %p178, %p179
      %p181 = pneg %p180
      // Predicated region
      $region9: #{tpu_custom_call.1} parent=5 // pred_check
        _
      $region10: #{tpu_custom_call.1} parent=5 // pred_check_branch
        %183 = sbr.rel (%p180) target = $region12
      $region11: #{tpu_custom_call.1} parent=5 // pred_region
        %s184 = ssub.s32 %s18, 1
        // Predicated region
        $region13: #{tpu_custom_call.1} parent=11 // pred_check
          %p185 = pneg %p79
        $region14: #{tpu_custom_call.1} parent=11 // pred_check_branch
          %187 = sbr.rel (%p185) target = $region16
        $region15: #{tpu_custom_call.1} parent=11 // pred_region
          %s189 = ssub.s32 3072, 3072
          %190 = vsyncadd [#allocation6], %s189
          %s191 = sshll.u32 [#allocation5], 4
          %s192 = int_to_ptr.vmem [resolvable:$true] %s191
          %197 = dma.hbm_to_vmem [thread:$0]  %s1, 3072, %s192, [#allocation6], 64, 64, 4
        $region16: #{tpu_custom_call.1} parent=11 // pred_fallthru
          _
        // Predicated region
        $region17: #{tpu_custom_call.1} parent=11 // pred_check
          %p198 = pneg %p100
        $region18: #{tpu_custom_call.1} parent=11 // pred_check_branch
          %200 = sbr.rel (%p198) target = $region20
        $region19: #{tpu_custom_call.1} parent=11 // pred_region
          _
        $region20: #{tpu_custom_call.1} parent=11 // pred_fallthru
          _
        // Predicated region
        $region21: #{tpu_custom_call.1} parent=11 // pred_check
          %p201 = pneg %p121
        $region22: #{tpu_custom_call.1} parent=11 // pred_check_branch
          %203 = sbr.rel (%p201) target = $region24
        $region23: #{tpu_custom_call.1} parent=11 // pred_region
          %s205 = ssub.s32 1024, 1024
          %206 = vsyncadd [#allocation6], %s205
          %s207 = sshll.u32 [#allocation7], 4
          %s208 = int_to_ptr.vmem [resolvable:$true] %s207
          %213 = dma.hbm_to_vmem [thread:$0]  %s3, 1024, %s208, [#allocation6], 64, 64, 4
        $region24: #{tpu_custom_call.1} parent=11 // pred_fallthru
          _
        // Predicated region
        $region25: #{tpu_custom_call.1} parent=11 // pred_check
          %p214 = pneg %p142
        $region26: #{tpu_custom_call.1} parent=11 // pred_check_branch
          %216 = sbr.rel (%p214) target = $region28
        $region27: #{tpu_custom_call.1} parent=11 // pred_region
          _
        $region28: #{tpu_custom_call.1} parent=11 // pred_fallthru
          _
      $region12: #{tpu_custom_call.1} parent=5 // pred_fallthru
        _
      %p217 = scmp.lt.s32.totalorder %s18, 2
      // Predicated region
      $region29: #{tpu_custom_call.1} parent=5 // pred_check
        %p218 = pneg %p217
      $region30: #{tpu_custom_call.1} parent=5 // pred_check_branch
        %220 = sbr.rel (%p218) target = $region32
      $region31: #{tpu_custom_call.1} parent=5 // pred_region
        // Predicated region
        $region33: #{tpu_custom_call.1} parent=31 // pred_check
          %p221 = pneg %p52
        $region34: #{tpu_custom_call.1} parent=31 // pred_check_branch
          %223 = sbr.rel (%p221) target = $region36
        $region35: #{tpu_custom_call.1} parent=31 // pred_region
          %s224 = sand.u32 %s42, 1
          %s225 = scalar_lea.sflag [#allocation3], %s224
          %s226 = sand.u32 %s42, 1
          %s227 = smul.addr %s226, 144
          %s228 = scalar_lea.vmem [#allocation2], %s227
          %s230 = ssub.s32 2304, 2304
          %231 = vsyncadd %s225, %s230
          %s232 = smul.addr %s26, 36
          %s233 = smul.addr %s25, 36
          %s234 = sadd.s32 %s232, %s233
          %s235 = smul.addr %s234, 64
          %s236 = scalar_lea.hbm %s0, %s235
          %s237 = sshll.u32 %s228, 4
          %s238 = int_to_ptr.vmem [resolvable:$true] %s237
          %243 = dma.hbm_to_vmem [thread:$0]  %s236, 2304, %s238, %s225, 64, 64, 4
        $region36: #{tpu_custom_call.1} parent=31 // pred_fallthru
          _
      $region32: #{tpu_custom_call.1} parent=5 // pred_fallthru
        _
      %p244 = scmp.le.s32.totalorder 1, %s18
      %p245 = scmp.lt.s32.totalorder %s18, 3
      %p246 = pnand %p244, %p245
      %p247 = pneg %p246
      // Predicated region
      $region37: #{tpu_custom_call.1} parent=5 // pred_check
        _
      $region38: #{tpu_custom_call.1} parent=5 // pred_check_branch
        %249 = sbr.rel (%p246) target = $region40
      $region39: #{tpu_custom_call.1} parent=5 // pred_region
        %s250 = ssub.s32 %s18, 1
        %s251 = sand.u32 %s45, 1
        %s252 = scalar_lea.sflag [#allocation3], %s251
        %s253 = sand.u32 %s45, 1
        %s254 = smul.addr %s253, 144
        %s255 = scalar_lea.vmem [#allocation2], %s254
        // Predicated region
        $region41: #{tpu_custom_call.1} parent=39 // pred_check
          %p256 = pneg %p58
        $region42: #{tpu_custom_call.1} parent=39 // pred_check_branch
          %258 = sbr.rel (%p256) target = $region44
        $region43: #{tpu_custom_call.1} parent=39 // pred_region
          %259 = dma.done %s252, 2304
        $region44: #{tpu_custom_call.1} parent=39 // pred_fallthru
          _
        // Predicated region
        $region45: #{tpu_custom_call.1} parent=39 // pred_check
          %p260 = pneg %p79
        $region46: #{tpu_custom_call.1} parent=39 // pred_check_branch
          %262 = sbr.rel (%p260) target = $region48
        $region47: #{tpu_custom_call.1} parent=39 // pred_region
          %263 = dma.done [#allocation6], 3072
        $region48: #{tpu_custom_call.1} parent=39 // pred_fallthru
          _
        // Predicated region
        $region49: #{tpu_custom_call.1} parent=39 // pred_check
          %p264 = pneg %p121
        $region50: #{tpu_custom_call.1} parent=39 // pred_check_branch
          %266 = sbr.rel (%p264) target = $region52
        $region51: #{tpu_custom_call.1} parent=39 // pred_region
          %267 = dma.done [#allocation6], 1024
        $region52: #{tpu_custom_call.1} parent=39 // pred_fallthru
          _
        %s268 = sand.u32 %s45, 1
        %s269 = scalar_lea.sflag [#allocation3], %s268
        %s270 = sand.u32 %s45, 1
        %s271 = smul.addr %s270, 144
        %s272 = scalar_lea.vmem [#allocation2], %s271
        %p273 = pneg %p58
        %p274 = pneg %p55
        %p275 = pneg %p79
        %p276 = pneg %p76
        %p277 = pneg %p100
        %p278 = pneg %p97
        %p279 = pneg %p121
        %p280 = pneg %p118
        %p281 = pneg %p142
        %p282 = pneg %p139
        %p283 = pneg %p170
        %p284 = pneg %p167
        %s285 = sand.u32 %s157, 1
        %s286 = scalar_lea.sflag [#allocation4], %s285
        %s287 = sand.u32 %s157, 1
        %s288 = smul.addr %s287, 256
        %s289 = scalar_lea.vmem [#allocation8], %s288
        %s290 = smul.u32 16, %s28
        %v292 = vld [vmem:[%s255] sm:$0xf]
        %v293 = vld [vmem:[%s255 + $0x4] sm:$0xf]
        %v294 = vld [vmem:[%s255 + $0x8] sm:$0xf]
        %v295 = vld [vmem:[%s255 + $0xc] sm:$0xf]
        %v296 = vld [vmem:[%s255 + $0x10] sm:$0xf]
        %v297 = vld [vmem:[%s255 + $0x14] sm:$0xf]
        %v298 = vld [vmem:[%s255 + $0x18] sm:$0xf]
        %v299 = vld [vmem:[%s255 + $0x1c] sm:$0xf]
        %v300 = vld [vmem:[%s255 + $0x20] sm:$0xf]
        %v301 = vld [vmem:[%s255 + $0x24] sm:$0xf]
        %v302 = vld [vmem:[%s255 + $0x28] sm:$0xf]
        %v303 = vld [vmem:[%s255 + $0x2c] sm:$0xf]
        %v304 = vld [vmem:[%s255 + $0x30] sm:$0xf]
        %v305 = vld [vmem:[%s255 + $0x34] sm:$0xf]
        %v306 = vld [vmem:[%s255 + $0x38] sm:$0xf]
        %v307 = vld [vmem:[%s255 + $0x3c] sm:$0xf]
        %v308 = vld [vmem:[%s255 + $0x40] sm:$0xf]
        %v309 = vld [vmem:[%s255 + $0x44] sm:$0xf]
        %v310 = vld [vmem:[%s255 + $0x48] sm:$0xf]
        %v311 = vld [vmem:[%s255 + $0x4c] sm:$0xf]
        %v312 = vld [vmem:[%s255 + $0x50] sm:$0xf]
        %v313 = vld [vmem:[%s255 + $0x54] sm:$0xf]
        %v314 = vld [vmem:[%s255 + $0x58] sm:$0xf]
        %v315 = vld [vmem:[%s255 + $0x5c] sm:$0xf]
        %v316 = vld [vmem:[%s255 + $0x60] sm:$0xf]
        %v317 = vld [vmem:[%s255 + $0x64] sm:$0xf]
        %v318 = vld [vmem:[%s255 + $0x68] sm:$0xf]
        %v319 = vld [vmem:[%s255 + $0x6c] sm:$0xf]
        %v320 = vld [vmem:[%s255 + $0x70] sm:$0xf]
        %v321 = vld [vmem:[%s255 + $0x74] sm:$0xf]
        %v322 = vld [vmem:[%s255 + $0x78] sm:$0xf]
        %v323 = vld [vmem:[%s255 + $0x7c] sm:$0xf]
        %v324 = vld [vmem:[#allocation5] sm:$0xf]
        %v325 = vld [vmem:[#allocation5 + $0x4] sm:$0xf]
        %v326 = vld [vmem:[#allocation5 + $0x8] sm:$0xf]
        %v327 = vld [vmem:[#allocation5 + $0xc] sm:$0xf]
        %v328 = vld [vmem:[#allocation5 + $0x10] sm:$0xf]
        %v329 = vld [vmem:[#allocation5 + $0x14] sm:$0xf]
        %v330 = vld [vmem:[#allocation5 + $0x18] sm:$0xf]
        %v331 = vld [vmem:[#allocation5 + $0x1c] sm:$0xf]
        %v332 = vld [vmem:[#allocation5 + $0x20] sm:$0xf]
        %v333 = vld [vmem:[#allocation5 + $0x24] sm:$0xf]
        %v334 = vld [vmem:[#allocation5 + $0x28] sm:$0xf]
        %v335 = vld [vmem:[#allocation5 + $0x2c] sm:$0xf]
        %v336 = vld [vmem:[#allocation5 + $0x30] sm:$0xf]
        %v337 = vld [vmem:[#allocation5 + $0x34] sm:$0xf]
        %v338 = vld [vmem:[#allocation5 + $0x38] sm:$0xf]
        %v339 = vld [vmem:[#allocation5 + $0x3c] sm:$0xf]
        %s340 = scalar_lea.vmem %s255, 8 [#allocation2]
        %v341 = vld [vmem:[%s340] sm:$0xf]
        %v342 = vld [vmem:[%s340 + $0x4] sm:$0xf]
        %v343 = vld [vmem:[%s340 + $0x8] sm:$0xf]
        %v344 = vld [vmem:[%s340 + $0xc] sm:$0xf]
        %v345 = vld [vmem:[%s340 + $0x10] sm:$0xf]
        %v346 = vld [vmem:[%s340 + $0x14] sm:$0xf]
        %v347 = vld [vmem:[%s340 + $0x18] sm:$0xf]
        %v348 = vld [vmem:[%s340 + $0x1c] sm:$0xf]
        %v349 = vld [vmem:[%s340 + $0x20] sm:$0xf]
        %v350 = vld [vmem:[%s340 + $0x24] sm:$0xf]
        %v351 = vld [vmem:[%s340 + $0x28] sm:$0xf]
        %v352 = vld [vmem:[%s340 + $0x2c] sm:$0xf]
        %v353 = vld [vmem:[%s340 + $0x30] sm:$0xf]
        %v354 = vld [vmem:[%s340 + $0x34] sm:$0xf]
        %v355 = vld [vmem:[%s340 + $0x38] sm:$0xf]
        %v356 = vld [vmem:[%s340 + $0x3c] sm:$0xf]
        %v357 = vld [vmem:[%s340 + $0x40] sm:$0xf]
        %v358 = vld [vmem:[%s340 + $0x44] sm:$0xf]
        %v359 = vld [vmem:[%s340 + $0x48] sm:$0xf]
        %v360 = vld [vmem:[%s340 + $0x4c] sm:$0xf]
        %v361 = vld [vmem:[%s340 + $0x50] sm:$0xf]
        %v362 = vld [vmem:[%s340 + $0x54] sm:$0xf]
        %v363 = vld [vmem:[%s340 + $0x58] sm:$0xf]
        %v364 = vld [vmem:[%s340 + $0x5c] sm:$0xf]
        %v365 = vld [vmem:[%s340 + $0x60] sm:$0xf]
        %v366 = vld [vmem:[%s340 + $0x64] sm:$0xf]
        %v367 = vld [vmem:[%s340 + $0x68] sm:$0xf]
        %v368 = vld [vmem:[%s340 + $0x6c] sm:$0xf]
        %v369 = vld [vmem:[%s340 + $0x70] sm:$0xf]
        %v370 = vld [vmem:[%s340 + $0x74] sm:$0xf]
        %v371 = vld [vmem:[%s340 + $0x78] sm:$0xf]
        %v372 = vld [vmem:[%s340 + $0x7c] sm:$0xf]
        %s373 = scalar_lea.vmem [#allocation5], 64
        %v374 = vld [vmem:[%s373] sm:$0xf]
        %v375 = vld [vmem:[%s373 + $0x4] sm:$0xf]
        %v376 = vld [vmem:[%s373 + $0x8] sm:$0xf]
        %v377 = vld [vmem:[%s373 + $0xc] sm:$0xf]
        %v378 = vld [vmem:[%s373 + $0x10] sm:$0xf]
        %v379 = vld [vmem:[%s373 + $0x14] sm:$0xf]
        %v380 = vld [vmem:[%s373 + $0x18] sm:$0xf]
        %v381 = vld [vmem:[%s373 + $0x1c] sm:$0xf]
        %v382 = vld [vmem:[%s373 + $0x20] sm:$0xf]
        %v383 = vld [vmem:[%s373 + $0x24] sm:$0xf]
        %v384 = vld [vmem:[%s373 + $0x28] sm:$0xf]
        %v385 = vld [vmem:[%s373 + $0x2c] sm:$0xf]
        %v386 = vld [vmem:[%s373 + $0x30] sm:$0xf]
        %v387 = vld [vmem:[%s373 + $0x34] sm:$0xf]
        %v388 = vld [vmem:[%s373 + $0x38] sm:$0xf]
        %v389 = vld [vmem:[%s373 + $0x3c] sm:$0xf]
        %v422 = vunpack.c.l.b16 %v341
        %v423 = vunpack.c.l.b16 %v342
        %v424 = vunpack.c.l.b16 %v343
        %v425 = vunpack.c.l.b16 %v344
        %v426 = vunpack.c.l.b16 %v345
        %v427 = vunpack.c.l.b16 %v346
        %v428 = vunpack.c.l.b16 %v347
        %v429 = vunpack.c.l.b16 %v348
        %v430 = vunpack.c.l.b16 %v349
        %v431 = vunpack.c.l.b16 %v350
        %v432 = vunpack.c.l.b16 %v351
        %v433 = vunpack.c.l.b16 %v352
        %v434 = vunpack.c.l.b16 %v353
        %v435 = vunpack.c.l.b16 %v354
        %v436 = vunpack.c.l.b16 %v355
        %v437 = vunpack.c.l.b16 %v356
        %v438 = vunpack.c.l.b16 %v357
        %v439 = vunpack.c.l.b16 %v358
        %v440 = vunpack.c.l.b16 %v359
        %v441 = vunpack.c.l.b16 %v360
        %v442 = vunpack.c.l.b16 %v361
        %v443 = vunpack.c.l.b16 %v362
        %v444 = vunpack.c.l.b16 %v363
        %v445 = vunpack.c.l.b16 %v364
        %v446 = vunpack.c.l.b16 %v365
        %v447 = vunpack.c.l.b16 %v366
        %v448 = vunpack.c.l.b16 %v367
        %v449 = vunpack.c.l.b16 %v368
        %v450 = vunpack.c.l.b16 %v369
        %v451 = vunpack.c.l.b16 %v370
        %v452 = vunpack.c.l.b16 %v371
        %v453 = vunpack.c.l.b16 %v372
        %v454 = vpack.c.b16 %v423, %v422
        %v455 = vpack.c.b16 %v425, %v424
        %v456 = vpack.c.b16 %v427, %v426
        %v457 = vpack.c.b16 %v429, %v428
        %v458 = vpack.c.b16 %v431, %v430
        %v459 = vpack.c.b16 %v433, %v432
        %v460 = vpack.c.b16 %v435, %v434
        %v461 = vpack.c.b16 %v437, %v436
        %v462 = vpack.c.b16 %v439, %v438
        %v463 = vpack.c.b16 %v441, %v440
        %v464 = vpack.c.b16 %v443, %v442
        %v465 = vpack.c.b16 %v445, %v444
        %v466 = vpack.c.b16 %v447, %v446
        %v467 = vpack.c.b16 %v449, %v448
        %v468 = vpack.c.b16 %v451, %v450
        %v469 = vpack.c.b16 %v453, %v452
        %v502 = vunpack.c.l.b16 %v374
        %v503 = vunpack.c.l.b16 %v375
        %v504 = vunpack.c.l.b16 %v376
        %v505 = vunpack.c.l.b16 %v377
        %v506 = vunpack.c.l.b16 %v378
        %v507 = vunpack.c.l.b16 %v379
        %v508 = vunpack.c.l.b16 %v380
        %v509 = vunpack.c.l.b16 %v381
        %v510 = vunpack.c.l.b16 %v382
        %v511 = vunpack.c.l.b16 %v383
        %v512 = vunpack.c.l.b16 %v384
        %v513 = vunpack.c.l.b16 %v385
        %v514 = vunpack.c.l.b16 %v386
        %v515 = vunpack.c.l.b16 %v387
        %v516 = vunpack.c.l.b16 %v388
        %v517 = vunpack.c.l.b16 %v389
        %v518 = vpack.c.b16 %v503, %v502
        %v519 = vpack.c.b16 %v505, %v504
        %v520 = vpack.c.b16 %v507, %v506
        %v521 = vpack.c.b16 %v509, %v508
        %v522 = vpack.c.b16 %v511, %v510
        %v523 = vpack.c.b16 %v513, %v512
        %v524 = vpack.c.b16 %v515, %v514
        %v525 = vpack.c.b16 %v517, %v516
        %534 = vmatprep.subr.bf16.mxu0 0
        %535 = vmatpush1.bf16.msra.mxu0 %v518
        %536 = vmatprep.subr.bf16.mxu0 0
        %537 = vmatpush1.bf16.msra.mxu0 %v519
        %538 = vmatprep.subr.bf16.mxu0 0
        %539 = vmatpush1.bf16.msra.mxu0 %v520
        %540 = vmatprep.subr.bf16.mxu0 0
        %541 = vmatpush1.bf16.msra.mxu0 %v521
        %542 = vmatprep.subr.bf16.mxu0 0
        %543 = vmatpush1.bf16.msra.mxu0 %v522
        %544 = vmatprep.subr.bf16.mxu0 0
        %545 = vmatpush1.bf16.msra.mxu0 %v523
        %546 = vmatprep.subr.bf16.mxu0 0
        %547 = vmatpush1.bf16.msra.mxu0 %v524
        %548 = vmatprep.subr.bf16.mxu0 0
        %549 = vmatpush1.bf16.msra.mxu0 %v525
        %550 = vmatprep.subr.bf16.mxu0 0
        %551 = vmatpush1.bf16.msra.mxu0 0
        %552 = vmatprep.subr.bf16.mxu0 0
        %553 = vmatpush1.bf16.msra.mxu0 0
        %554 = vmatprep.subr.bf16.mxu0 0
        %555 = vmatpush1.bf16.msra.mxu0 0
        %556 = vmatprep.subr.bf16.mxu0 0
        %557 = vmatpush1.bf16.msra.mxu0 0
        %558 = vmatprep.subr.bf16.mxu0 0
        %559 = vmatpush1.bf16.msra.mxu0 0
        %560 = vmatprep.subr.bf16.mxu0 0
        %561 = vmatpush1.bf16.msra.mxu0 0
        %562 = vmatprep.subr.bf16.mxu0 0
        %563 = vmatpush1.bf16.msra.mxu0 0
        %564 = vmatprep.subr.bf16.mxu0 0
        %565 = vmatpush1.bf16.msra.mxu0 0
        %566 = vmatprep.mubr.bf16.mxu0 0
        %567 = vmatmul.mubr.bf16.gmra.mrb[0].mxu0 %v454
        %v568 = vpop.f32.mrb[0].mxu0
        %v569 = vadd.f32 0.0, %v568
        %v570 = vpop.f32.mrb[0].mxu0
        %v571 = vpop.f32.mrb[0].mxu0
        %v572 = vadd.f32 0.0, %v571
        %v573 = vpop.f32.mrb[0].mxu0
        %574 = vmatprep.mubr.bf16.mxu0 0
        %575 = vmatmul.mubr.bf16.gmra.mrb[0].mxu0 %v455
        %v576 = vpop.f32.mrb[0].mxu0
        %v577 = vadd.f32 0.0, %v576
        %v578 = vpop.f32.mrb[0].mxu0
        %v579 = vpop.f32.mrb[0].mxu0
        %v580 = vadd.f32 0.0, %v579
        %v581 = vpop.f32.mrb[0].mxu0
        %582 = vmatprep.mubr.bf16.mxu0 0
        %583 = vmatmul.mubr.bf16.gmra.mrb[0].mxu0 %v456
        %v584 = vpop.f32.mrb[0].mxu0
        %v585 = vadd.f32 0.0, %v584
        %v586 = vpop.f32.mrb[0].mxu0
        %v587 = vpop.f32.mrb[0].mxu0
        %v588 = vadd.f32 0.0, %v587
        %v589 = vpop.f32.mrb[0].mxu0
        %590 = vmatprep.mubr.bf16.mxu0 0
        %591 = vmatmul.mubr.bf16.gmra.mrb[0].mxu0 %v457
        %v592 = vpop.f32.mrb[0].mxu0
        %v593 = vadd.f32 0.0, %v592
        %v594 = vpop.f32.mrb[0].mxu0
        %v595 = vpop.f32.mrb[0].mxu0
        %v596 = vadd.f32 0.0, %v595
        %v597 = vpop.f32.mrb[0].mxu0
        %598 = vmatprep.mubr.bf16.mxu0 0
        %599 = vmatmul.mubr.bf16.gmra.mrb[0].mxu0 %v458
        %v600 = vpop.f32.mrb[0].mxu0
        %v601 = vadd.f32 0.0, %v600
        %v602 = vpop.f32.mrb[0].mxu0
        %v603 = vpop.f32.mrb[0].mxu0
        %v604 = vadd.f32 0.0, %v603
        %v605 = vpop.f32.mrb[0].mxu0
        %606 = vmatprep.mubr.bf16.mxu0 0
        %607 = vmatmul.mubr.bf16.gmra.mrb[0].mxu0 %v459
        %v608 = vpop.f32.mrb[0].mxu0
        %v609 = vadd.f32 0.0, %v608
        %v610 = vpop.f32.mrb[0].mxu0
        %v611 = vpop.f32.mrb[0].mxu0
        %v612 = vadd.f32 0.0, %v611
        %v613 = vpop.f32.mrb[0].mxu0
        %614 = vmatprep.mubr.bf16.mxu0 0
        %615 = vmatmul.mubr.bf16.gmra.mrb[0].mxu0 %v460
        %v616 = vpop.f32.mrb[0].mxu0
        %v617 = vadd.f32 0.0, %v616
        %v618 = vpop.f32.mrb[0].mxu0
        %v619 = vpop.f32.mrb[0].mxu0
        %v620 = vadd.f32 0.0, %v619
        %v621 = vpop.f32.mrb[0].mxu0
        %622 = vmatprep.mubr.bf16.mxu0 0
        %623 = vmatmul.mubr.bf16.gmra.mrb[0].mxu0 %v461
        %v624 = vpop.f32.mrb[0].mxu0
        %v625 = vadd.f32 0.0, %v624
        %v626 = vpop.f32.mrb[0].mxu0
        %v627 = vpop.f32.mrb[0].mxu0
        %v628 = vadd.f32 0.0, %v627
        %v629 = vpop.f32.mrb[0].mxu0
        %630 = vmatprep.mubr.bf16.mxu0 0
        %631 = vmatmul.mubr.bf16.gmra.mrb[0].mxu0 %v462
        %v632 = vpop.f32.mrb[0].mxu0
        %v633 = vadd.f32 0.0, %v632
        %v634 = vpop.f32.mrb[0].mxu0
        %v635 = vpop.f32.mrb[0].mxu0
        %v636 = vadd.f32 0.0, %v635
        %v637 = vpop.f32.mrb[0].mxu0
        %638 = vmatprep.mubr.bf16.mxu0 0
        %639 = vmatmul.mubr.bf16.gmra.mrb[0].mxu0 %v463
        %v640 = vpop.f32.mrb[0].mxu0
        %v641 = vadd.f32 0.0, %v640
        %v642 = vpop.f32.mrb[0].mxu0
        %v643 = vpop.f32.mrb[0].mxu0
        %v644 = vadd.f32 0.0, %v643
        %v645 = vpop.f32.mrb[0].mxu0
        %646 = vmatprep.mubr.bf16.mxu0 0
        %647 = vmatmul.mubr.bf16.gmra.mrb[0].mxu0 %v464
        %v648 = vpop.f32.mrb[0].mxu0
        %v649 = vadd.f32 0.0, %v648
        %v650 = vpop.f32.mrb[0].mxu0
        %v651 = vpop.f32.mrb[0].mxu0
        %v652 = vadd.f32 0.0, %v651
        %v653 = vpop.f32.mrb[0].mxu0
        %654 = vmatprep.mubr.bf16.mxu0 0
        %655 = vmatmul.mubr.bf16.gmra.mrb[0].mxu0 %v465
        %v656 = vpop.f32.mrb[0].mxu0
        %v657 = vadd.f32 0.0, %v656
        %v658 = vpop.f32.mrb[0].mxu0
        %v659 = vpop.f32.mrb[0].mxu0
        %v660 = vadd.f32 0.0, %v659
        %v661 = vpop.f32.mrb[0].mxu0
        %662 = vmatprep.mubr.bf16.mxu0 0
        %663 = vmatmul.mubr.bf16.gmra.mrb[0].mxu0 %v466
        %v664 = vpop.f32.mrb[0].mxu0
        %v665 = vadd.f32 0.0, %v664
        %v666 = vpop.f32.mrb[0].mxu0
        %v667 = vpop.f32.mrb[0].mxu0
        %v668 = vadd.f32 0.0, %v667
        %v669 = vpop.f32.mrb[0].mxu0
        %670 = vmatprep.mubr.bf16.mxu0 0
        %671 = vmatmul.mubr.bf16.gmra.mrb[0].mxu0 %v467
        %v672 = vpop.f32.mrb[0].mxu0
        %v673 = vadd.f32 0.0, %v672
        %v674 = vpop.f32.mrb[0].mxu0
        %v675 = vpop.f32.mrb[0].mxu0
        %v676 = vadd.f32 0.0, %v675
        %v677 = vpop.f32.mrb[0].mxu0
        %678 = vmatprep.mubr.bf16.mxu0 0
        %679 = vmatmul.mubr.bf16.gmra.mrb[0].mxu0 %v468
        %v680 = vpop.f32.mrb[0].mxu0
        %v681 = vadd.f32 0.0, %v680
        %v682 = vpop.f32.mrb[0].mxu0
        %v683 = vpop.f32.mrb[0].mxu0
        %v684 = vadd.f32 0.0, %v683
        %v685 = vpop.f32.mrb[0].mxu0
        %686 = vmatprep.mubr.bf16.mxu0 0
        %687 = vmatmul.mubr.bf16.gmra.mrb[0].mxu0 %v469
        %v688 = vpop.f32.mrb[0].mxu0
        %v689 = vadd.f32 0.0, %v688
        %v690 = vpop.f32.mrb[0].mxu0
        %v691 = vpop.f32.mrb[0].mxu0
        %v692 = vadd.f32 0.0, %v691
        %v693 = vpop.f32.mrb[0].mxu0
        %694 = vdwg.mxu0
        %v727 = vunpack.c.l.b16 %v292
        %v728 = vunpack.c.l.b16 %v293
        %v729 = vunpack.c.l.b16 %v294
        %v730 = vunpack.c.l.b16 %v295
        %v731 = vunpack.c.l.b16 %v296
        %v732 = vunpack.c.l.b16 %v297
        %v733 = vunpack.c.l.b16 %v298
        %v734 = vunpack.c.l.b16 %v299
        %v735 = vunpack.c.l.b16 %v300
        %v736 = vunpack.c.l.b16 %v301
        %v737 = vunpack.c.l.b16 %v302
        %v738 = vunpack.c.l.b16 %v303
        %v739 = vunpack.c.l.b16 %v304
        %v740 = vunpack.c.l.b16 %v305
        %v741 = vunpack.c.l.b16 %v306
        %v742 = vunpack.c.l.b16 %v307
        %v743 = vunpack.c.l.b16 %v308
        %v744 = vunpack.c.l.b16 %v309
        %v745 = vunpack.c.l.b16 %v310
        %v746 = vunpack.c.l.b16 %v311
        %v747 = vunpack.c.l.b16 %v312
        %v748 = vunpack.c.l.b16 %v313
        %v749 = vunpack.c.l.b16 %v314
        %v750 = vunpack.c.l.b16 %v315
        %v751 = vunpack.c.l.b16 %v316
        %v752 = vunpack.c.l.b16 %v317
        %v753 = vunpack.c.l.b16 %v318
        %v754 = vunpack.c.l.b16 %v319
        %v755 = vunpack.c.l.b16 %v320
        %v756 = vunpack.c.l.b16 %v321
        %v757 = vunpack.c.l.b16 %v322
        %v758 = vunpack.c.l.b16 %v323
        %v759 = vpack.c.b16 %v728, %v727
        %v760 = vpack.c.b16 %v730, %v729
        %v761 = vpack.c.b16 %v732, %v731
        %v762 = vpack.c.b16 %v734, %v733
        %v763 = vpack.c.b16 %v736, %v735
        %v764 = vpack.c.b16 %v738, %v737
        %v765 = vpack.c.b16 %v740, %v739
        %v766 = vpack.c.b16 %v742, %v741
        %v767 = vpack.c.b16 %v744, %v743
        %v768 = vpack.c.b16 %v746, %v745
        %v769 = vpack.c.b16 %v748, %v747
        %v770 = vpack.c.b16 %v750, %v749
        %v771 = vpack.c.b16 %v752, %v751
        %v772 = vpack.c.b16 %v754, %v753
        %v773 = vpack.c.b16 %v756, %v755
        %v774 = vpack.c.b16 %v758, %v757
        %v807 = vunpack.c.l.b16 %v324
        %v808 = vunpack.c.l.b16 %v325
        %v809 = vunpack.c.l.b16 %v326
        %v810 = vunpack.c.l.b16 %v327
        %v811 = vunpack.c.l.b16 %v328
        %v812 = vunpack.c.l.b16 %v329
        %v813 = vunpack.c.l.b16 %v330
        %v814 = vunpack.c.l.b16 %v331
        %v815 = vunpack.c.l.b16 %v332
        %v816 = vunpack.c.l.b16 %v333
        %v817 = vunpack.c.l.b16 %v334
        %v818 = vunpack.c.l.b16 %v335
        %v819 = vunpack.c.l.b16 %v336
        %v820 = vunpack.c.l.b16 %v337
        %v821 = vunpack.c.l.b16 %v338
        %v822 = vunpack.c.l.b16 %v339
        %v823 = vpack.c.b16 %v808, %v807
        %v824 = vpack.c.b16 %v810, %v809
        %v825 = vpack.c.b16 %v812, %v811
        %v826 = vpack.c.b16 %v814, %v813
        %v827 = vpack.c.b16 %v816, %v815
        %v828 = vpack.c.b16 %v818, %v817
        %v829 = vpack.c.b16 %v820, %v819
        %v830 = vpack.c.b16 %v822, %v821
        %839 = vmatprep.subr.bf16.mxu0 0
        %840 = vmatpush1.bf16.msra.mxu0 %v823
        %841 = vmatprep.subr.bf16.mxu0 0
        %842 = vmatpush1.bf16.msra.mxu0 %v824
        %843 = vmatprep.subr.bf16.mxu0 0
        %844 = vmatpush1.bf16.msra.mxu0 %v825
        %845 = vmatprep.subr.bf16.mxu0 0
        %846 = vmatpush1.bf16.msra.mxu0 %v826
        %847 = vmatprep.subr.bf16.mxu0 0
        %848 = vmatpush1.bf16.msra.mxu0 %v827
        %849 = vmatprep.subr.bf16.mxu0 0
        %850 = vmatpush1.bf16.msra.mxu0 %v828
        %851 = vmatprep.subr.bf16.mxu0 0
        %852 = vmatpush1.bf16.msra.mxu0 %v829
        %853 = vmatprep.subr.bf16.mxu0 0
        %854 = vmatpush1.bf16.msra.mxu0 %v830
        %855 = vmatprep.subr.bf16.mxu0 0
        %856 = vmatpush1.bf16.msra.mxu0 0
        %857 = vmatprep.subr.bf16.mxu0 0
        %858 = vmatpush1.bf16.msra.mxu0 0
        %859 = vmatprep.subr.bf16.mxu0 0
        %860 = vmatpush1.bf16.msra.mxu0 0
        %861 = vmatprep.subr.bf16.mxu0 0
        %862 = vmatpush1.bf16.msra.mxu0 0
        %863 = vmatprep.subr.bf16.mxu0 0
        %864 = vmatpush1.bf16.msra.mxu0 0
        %865 = vmatprep.subr.bf16.mxu0 0
        %866 = vmatpush1.bf16.msra.mxu0 0
        %867 = vmatprep.subr.bf16.mxu0 0
        %868 = vmatpush1.bf16.msra.mxu0 0
        %869 = vmatprep.subr.bf16.mxu0 0
        %870 = vmatpush1.bf16.msra.mxu0 0
        %871 = vmatprep.mubr.bf16.mxu0 0
        %872 = vmatmul.mubr.bf16.gmra.mrb[0].mxu0 %v759
        %v873 = vpop.f32.mrb[0].mxu0
        %v874 = vadd.f32 %v569, %v873
        %v875 = vpop.f32.mrb[0].mxu0
        %v876 = vpop.f32.mrb[0].mxu0
        %v877 = vadd.f32 %v572, %v876
        %v878 = vpop.f32.mrb[0].mxu0
        %879 = vmatprep.mubr.bf16.mxu0 0
        %880 = vmatmul.mubr.bf16.gmra.mrb[0].mxu0 %v760
        %v881 = vpop.f32.mrb[0].mxu0
        %v882 = vadd.f32 %v577, %v881
        %v883 = vpop.f32.mrb[0].mxu0
        %v884 = vpop.f32.mrb[0].mxu0
        %v885 = vadd.f32 %v580, %v884
        %v886 = vpop.f32.mrb[0].mxu0
        %887 = vmatprep.mubr.bf16.mxu0 0
        %888 = vmatmul.mubr.bf16.gmra.mrb[0].mxu0 %v761
        %v889 = vpop.f32.mrb[0].mxu0
        %v890 = vadd.f32 %v585, %v889
        %v891 = vpop.f32.mrb[0].mxu0
        %v892 = vpop.f32.mrb[0].mxu0
        %v893 = vadd.f32 %v588, %v892
        %v894 = vpop.f32.mrb[0].mxu0
        %895 = vmatprep.mubr.bf16.mxu0 0
        %896 = vmatmul.mubr.bf16.gmra.mrb[0].mxu0 %v762
        %v897 = vpop.f32.mrb[0].mxu0
        %v898 = vadd.f32 %v593, %v897
        %v899 = vpop.f32.mrb[0].mxu0
        %v900 = vpop.f32.mrb[0].mxu0
        %v901 = vadd.f32 %v596, %v900
        %v902 = vpop.f32.mrb[0].mxu0
        %903 = vmatprep.mubr.bf16.mxu0 0
        %904 = vmatmul.mubr.bf16.gmra.mrb[0].mxu0 %v763
        %v905 = vpop.f32.mrb[0].mxu0
        %v906 = vadd.f32 %v601, %v905
        %v907 = vpop.f32.mrb[0].mxu0
        %v908 = vpop.f32.mrb[0].mxu0
        %v909 = vadd.f32 %v604, %v908
        %v910 = vpop.f32.mrb[0].mxu0
        %911 = vmatprep.mubr.bf16.mxu0 0
        %912 = vmatmul.mubr.bf16.gmra.mrb[0].mxu0 %v764
        %v913 = vpop.f32.mrb[0].mxu0
        %v914 = vadd.f32 %v609, %v913
        %v915 = vpop.f32.mrb[0].mxu0
        %v916 = vpop.f32.mrb[0].mxu0
        %v917 = vadd.f32 %v612, %v916
        %v918 = vpop.f32.mrb[0].mxu0
        %919 = vmatprep.mubr.bf16.mxu0 0
        %920 = vmatmul.mubr.bf16.gmra.mrb[0].mxu0 %v765
        %v921 = vpop.f32.mrb[0].mxu0
        %v922 = vadd.f32 %v617, %v921
        %v923 = vpop.f32.mrb[0].mxu0
        %v924 = vpop.f32.mrb[0].mxu0
        %v925 = vadd.f32 %v620, %v924
        %v926 = vpop.f32.mrb[0].mxu0
        %927 = vmatprep.mubr.bf16.mxu0 0
        %928 = vmatmul.mubr.bf16.gmra.mrb[0].mxu0 %v766
        %v929 = vpop.f32.mrb[0].mxu0
        %v930 = vadd.f32 %v625, %v929
        %v931 = vpop.f32.mrb[0].mxu0
        %v932 = vpop.f32.mrb[0].mxu0
        %v933 = vadd.f32 %v628, %v932
        %v934 = vpop.f32.mrb[0].mxu0
        %935 = vmatprep.mubr.bf16.mxu0 0
        %936 = vmatmul.mubr.bf16.gmra.mrb[0].mxu0 %v767
        %v937 = vpop.f32.mrb[0].mxu0
        %v938 = vadd.f32 %v633, %v937
        %v939 = vpop.f32.mrb[0].mxu0
        %v940 = vpop.f32.mrb[0].mxu0
        %v941 = vadd.f32 %v636, %v940
        %v942 = vpop.f32.mrb[0].mxu0
        %943 = vmatprep.mubr.bf16.mxu0 0
        %944 = vmatmul.mubr.bf16.gmra.mrb[0].mxu0 %v768
        %v945 = vpop.f32.mrb[0].mxu0
        %v946 = vadd.f32 %v641, %v945
        %v947 = vpop.f32.mrb[0].mxu0
        %v948 = vpop.f32.mrb[0].mxu0
        %v949 = vadd.f32 %v644, %v948
        %v950 = vpop.f32.mrb[0].mxu0
        %951 = vmatprep.mubr.bf16.mxu0 0
        %952 = vmatmul.mubr.bf16.gmra.mrb[0].mxu0 %v769
        %v953 = vpop.f32.mrb[0].mxu0
        %v954 = vadd.f32 %v649, %v953
        %v955 = vpop.f32.mrb[0].mxu0
        %v956 = vpop.f32.mrb[0].mxu0
        %v957 = vadd.f32 %v652, %v956
        %v958 = vpop.f32.mrb[0].mxu0
        %959 = vmatprep.mubr.bf16.mxu0 0
        %960 = vmatmul.mubr.bf16.gmra.mrb[0].mxu0 %v770
        %v961 = vpop.f32.mrb[0].mxu0
        %v962 = vadd.f32 %v657, %v961
        %v963 = vpop.f32.mrb[0].mxu0
        %v964 = vpop.f32.mrb[0].mxu0
        %v965 = vadd.f32 %v660, %v964
        %v966 = vpop.f32.mrb[0].mxu0
        %967 = vmatprep.mubr.bf16.mxu0 0
        %968 = vmatmul.mubr.bf16.gmra.mrb[0].mxu0 %v771
        %v969 = vpop.f32.mrb[0].mxu0
        %v970 = vadd.f32 %v665, %v969
        %v971 = vpop.f32.mrb[0].mxu0
        %v972 = vpop.f32.mrb[0].mxu0
        %v973 = vadd.f32 %v668, %v972
        %v974 = vpop.f32.mrb[0].mxu0
        %975 = vmatprep.mubr.bf16.mxu0 0
        %976 = vmatmul.mubr.bf16.gmra.mrb[0].mxu0 %v772
        %v977 = vpop.f32.mrb[0].mxu0
        %v978 = vadd.f32 %v673, %v977
        %v979 = vpop.f32.mrb[0].mxu0
        %v980 = vpop.f32.mrb[0].mxu0
        %v981 = vadd.f32 %v676, %v980
        %v982 = vpop.f32.mrb[0].mxu0
        %983 = vmatprep.mubr.bf16.mxu0 0
        %984 = vmatmul.mubr.bf16.gmra.mrb[0].mxu0 %v773
        %v985 = vpop.f32.mrb[0].mxu0
        %v986 = vadd.f32 %v681, %v985
        %v987 = vpop.f32.mrb[0].mxu0
        %v988 = vpop.f32.mrb[0].mxu0
        %v989 = vadd.f32 %v684, %v988
        %v990 = vpop.f32.mrb[0].mxu0
        %991 = vmatprep.mubr.bf16.mxu0 0
        %992 = vmatmul.mubr.bf16.gmra.mrb[0].mxu0 %v774
        %v993 = vpop.f32.mrb[0].mxu0
        %v994 = vadd.f32 %v689, %v993
        %v995 = vpop.f32.mrb[0].mxu0
        %v996 = vpop.f32.mrb[0].mxu0
        %v997 = vadd.f32 %v692, %v996
        %v998 = vpop.f32.mrb[0].mxu0
        %999 = vdwg.mxu0
        %s1000 = scalar_lea.vmem %s255, 16 [#allocation2]
        %v1001 = vld [vmem:[%s1000] sm:$0xf]
        %v1002 = vld [vmem:[%s1000 + $0x4] sm:$0xf]
        %v1003 = vld [vmem:[%s1000 + $0x8] sm:$0xf]
        %v1004 = vld [vmem:[%s1000 + $0xc] sm:$0xf]
        %v1005 = vld [vmem:[%s1000 + $0x10] sm:$0xf]
        %v1006 = vld [vmem:[%s1000 + $0x14] sm:$0xf]
        %v1007 = vld [vmem:[%s1000 + $0x18] sm:$0xf]
        %v1008 = vld [vmem:[%s1000 + $0x1c] sm:$0xf]
        %v1009 = vld [vmem:[%s1000 + $0x20] sm:$0xf]
        %v1010 = vld [vmem:[%s1000 + $0x24] sm:$0xf]
        %v1011 = vld [vmem:[%s1000 + $0x28] sm:$0xf]
        %v1012 = vld [vmem:[%s1000 + $0x2c] sm:$0xf]
        %v1013 = vld [vmem:[%s1000 + $0x30] sm:$0xf]
        %v1014 = vld [vmem:[%s1000 + $0x34] sm:$0xf]
        %v1015 = vld [vmem:[%s1000 + $0x38] sm:$0xf]
        %v1016 = vld [vmem:[%s1000 + $0x3c] sm:$0xf]
        %v1017 = vld [vmem:[%s1000 + $0x40] sm:$0xf]
        %v1018 = vld [vmem:[%s1000 + $0x44] sm:$0xf]
        %v1019 = vld [vmem:[%s1000 + $0x48] sm:$0xf]
        %v1020 = vld [vmem:[%s1000 + $0x4c] sm:$0xf]
        %v1021 = vld [vmem:[%s1000 + $0x50] sm:$0xf]
        %v1022 = vld [vmem:[%s1000 + $0x54] sm:$0xf]
        %v1023 = vld [vmem:[%s1000 + $0x58] sm:$0xf]
        %v1024 = vld [vmem:[%s1000 + $0x5c] sm:$0xf]
        %v1025 = vld [vmem:[%s1000 + $0x60] sm:$0xf]
        %v1026 = vld [vmem:[%s1000 + $0x64] sm:$0xf]
        %v1027 = vld [vmem:[%s1000 + $0x68] sm:$0xf]
        %v1028 = vld [vmem:[%s1000 + $0x6c] sm:$0xf]
        %v1029 = vld [vmem:[%s1000 + $0x70] sm:$0xf]
        %v1030 = vld [vmem:[%s1000 + $0x74] sm:$0xf]
        %v1031 = vld [vmem:[%s1000 + $0x78] sm:$0xf]
        %v1032 = vld [vmem:[%s1000 + $0x7c] sm:$0xf]
        %s1033 = scalar_lea.vmem [#allocation5], 128
        %v1034 = vld [vmem:[%s1033] sm:$0xf]
        %v1035 = vld [vmem:[%s1033 + $0x4] sm:$0xf]
        %v1036 = vld [vmem:[%s1033 + $0x8] sm:$0xf]
        %v1037 = vld [vmem:[%s1033 + $0xc] sm:$0xf]
        %v1038 = vld [vmem:[%s1033 + $0x10] sm:$0xf]
        %v1039 = vld [vmem:[%s1033 + $0x14] sm:$0xf]
        %v1040 = vld [vmem:[%s1033 + $0x18] sm:$0xf]
        %v1041 = vld [vmem:[%s1033 + $0x1c] sm:$0xf]
        %v1042 = vld [vmem:[%s1033 + $0x20] sm:$0xf]
        %v1043 = vld [vmem:[%s1033 + $0x24] sm:$0xf]
        %v1044 = vld [vmem:[%s1033 + $0x28] sm:$0xf]
        %v1045 = vld [vmem:[%s1033 + $0x2c] sm:$0xf]
        %v1046 = vld [vmem:[%s1033 + $0x30] sm:$0xf]
        %v1047 = vld [vmem:[%s1033 + $0x34] sm:$0xf]
        %v1048 = vld [vmem:[%s1033 + $0x38] sm:$0xf]
        %v1049 = vld [vmem:[%s1033 + $0x3c] sm:$0xf]
        %v1082 = vunpack.c.l.b16 %v1001
        %v1083 = vunpack.c.l.b16 %v1002
        %v1084 = vunpack.c.l.b16 %v1003
        %v1085 = vunpack.c.l.b16 %v1004
        %v1086 = vunpack.c.l.b16 %v1005
        %v1087 = vunpack.c.l.b16 %v1006
        %v1088 = vunpack.c.l.b16 %v1007
        %v1089 = vunpack.c.l.b16 %v1008
        %v1090 = vunpack.c.l.b16 %v1009
        %v1091 = vunpack.c.l.b16 %v1010
        %v1092 = vunpack.c.l.b16 %v1011
        %v1093 = vunpack.c.l.b16 %v1012
        %v1094 = vunpack.c.l.b16 %v1013
        %v1095 = vunpack.c.l.b16 %v1014
        %v1096 = vunpack.c.l.b16 %v1015
        %v1097 = vunpack.c.l.b16 %v1016
        %v1098 = vunpack.c.l.b16 %v1017
        %v1099 = vunpack.c.l.b16 %v1018
        %v1100 = vunpack.c.l.b16 %v1019
        %v1101 = vunpack.c.l.b16 %v1020
        %v1102 = vunpack.c.l.b16 %v1021
        %v1103 = vunpack.c.l.b16 %v1022
        %v1104 = vunpack.c.l.b16 %v1023
        %v1105 = vunpack.c.l.b16 %v1024
        %v1106 = vunpack.c.l.b16 %v1025
        %v1107 = vunpack.c.l.b16 %v1026
        %v1108 = vunpack.c.l.b16 %v1027
        %v1109 = vunpack.c.l.b16 %v1028
        %v1110 = vunpack.c.l.b16 %v1029
        %v1111 = vunpack.c.l.b16 %v1030
        %v1112 = vunpack.c.l.b16 %v1031
        %v1113 = vunpack.c.l.b16 %v1032
        %v1114 = vpack.c.b16 %v1083, %v1082
        %v1115 = vpack.c.b16 %v1085, %v1084
        %v1116 = vpack.c.b16 %v1087, %v1086
        %v1117 = vpack.c.b16 %v1089, %v1088
        %v1118 = vpack.c.b16 %v1091, %v1090
        %v1119 = vpack.c.b16 %v1093, %v1092
        %v1120 = vpack.c.b16 %v1095, %v1094
        %v1121 = vpack.c.b16 %v1097, %v1096
        %v1122 = vpack.c.b16 %v1099, %v1098
        %v1123 = vpack.c.b16 %v1101, %v1100
        %v1124 = vpack.c.b16 %v1103, %v1102
        %v1125 = vpack.c.b16 %v1105, %v1104
        %v1126 = vpack.c.b16 %v1107, %v1106
        %v1127 = vpack.c.b16 %v1109, %v1108
        %v1128 = vpack.c.b16 %v1111, %v1110
        %v1129 = vpack.c.b16 %v1113, %v1112
        %v1162 = vunpack.c.l.b16 %v1034
        %v1163 = vunpack.c.l.b16 %v1035
        %v1164 = vunpack.c.l.b16 %v1036
        %v1165 = vunpack.c.l.b16 %v1037
        %v1166 = vunpack.c.l.b16 %v1038
        %v1167 = vunpack.c.l.b16 %v1039
        %v1168 = vunpack.c.l.b16 %v1040
        %v1169 = vunpack.c.l.b16 %v1041
        %v1170 = vunpack.c.l.b16 %v1042
        %v1171 = vunpack.c.l.b16 %v1043
        %v1172 = vunpack.c.l.b16 %v1044
        %v1173 = vunpack.c.l.b16 %v1045
        %v1174 = vunpack.c.l.b16 %v1046
        %v1175 = vunpack.c.l.b16 %v1047
        %v1176 = vunpack.c.l.b16 %v1048
        %v1177 = vunpack.c.l.b16 %v1049
        %v1178 = vpack.c.b16 %v1163, %v1162
        %v1179 = vpack.c.b16 %v1165, %v1164
        %v1180 = vpack.c.b16 %v1167, %v1166
        %v1181 = vpack.c.b16 %v1169, %v1168
        %v1182 = vpack.c.b16 %v1171, %v1170
        %v1183 = vpack.c.b16 %v1173, %v1172
        %v1184 = vpack.c.b16 %v1175, %v1174
        %v1185 = vpack.c.b16 %v1177, %v1176
        %1194 = vmatprep.subr.bf16.mxu0 0
        %1195 = vmatpush1.bf16.msra.mxu0 %v1178
        %1196 = vmatprep.subr.bf16.mxu0 0
        %1197 = vmatpush1.bf16.msra.mxu0 %v1179
        %1198 = vmatprep.subr.bf16.mxu0 0
        %1199 = vmatpush1.bf16.msra.mxu0 %v1180
        %1200 = vmatprep.subr.bf16.mxu0 0
        %1201 = vmatpush1.bf16.msra.mxu0 %v1181
        %1202 = vmatprep.subr.bf16.mxu0 0
        %1203 = vmatpush1.bf16.msra.mxu0 %v1182
        %1204 = vmatprep.subr.bf16.mxu0 0
        %1205 = vmatpush1.bf16.msra.mxu0 %v1183
        %1206 = vmatprep.subr.bf16.mxu0 0
        %1207 = vmatpush1.bf16.msra.mxu0 %v1184
        %1208 = vmatprep.subr.bf16.mxu0 0
        %1209 = vmatpush1.bf16.msra.mxu0 %v1185
        %1210 = vmatprep.subr.bf16.mxu0 0
        %1211 = vmatpush1.bf16.msra.mxu0 0
        %1212 = vmatprep.subr.bf16.mxu0 0
        %1213 = vmatpush1.bf16.msra.mxu0 0
        %1214 = vmatprep.subr.bf16.mxu0 0
        %1215 = vmatpush1.bf16.msra.mxu0 0
        %1216 = vmatprep.subr.bf16.mxu0 0
        %1217 = vmatpush1.bf16.msra.mxu0 0
        %1218 = vmatprep.subr.bf16.mxu0 0
        %1219 = vmatpush1.bf16.msra.mxu0 0
        %1220 = vmatprep.subr.bf16.mxu0 0
        %1221 = vmatpush1.bf16.msra.mxu0 0
        %1222 = vmatprep.subr.bf16.mxu0 0
        %1223 = vmatpush1.bf16.msra.mxu0 0
        %1224 = vmatprep.subr.bf16.mxu0 0
        %1225 = vmatpush1.bf16.msra.mxu0 0
        %1226 = vmatprep.mubr.bf16.mxu0 0
        %1227 = vmatmul.mubr.bf16.gmra.mrb[0].mxu0 %v1114
        %v1228 = vpop.f32.mrb[0].mxu0
        %v1229 = vadd.f32 0.0, %v1228
        %v1230 = vpop.f32.mrb[0].mxu0
        %v1231 = vpop.f32.mrb[0].mxu0
        %v1232 = vadd.f32 0.0, %v1231
        %v1233 = vpop.f32.mrb[0].mxu0
        %1234 = vmatprep.mubr.bf16.mxu0 0
        %1235 = vmatmul.mubr.bf16.gmra.mrb[0].mxu0 %v1115
        %v1236 = vpop.f32.mrb[0].mxu0
        %v1237 = vadd.f32 0.0, %v1236
        %v1238 = vpop.f32.mrb[0].mxu0
        %v1239 = vpop.f32.mrb[0].mxu0
        %v1240 = vadd.f32 0.0, %v1239
        %v1241 = vpop.f32.mrb[0].mxu0
        %1242 = vmatprep.mubr.bf16.mxu0 0
        %1243 = vmatmul.mubr.bf16.gmra.mrb[0].mxu0 %v1116
        %v1244 = vpop.f32.mrb[0].mxu0
        %v1245 = vadd.f32 0.0, %v1244
        %v1246 = vpop.f32.mrb[0].mxu0
        %v1247 = vpop.f32.mrb[0].mxu0
        %v1248 = vadd.f32 0.0, %v1247
        %v1249 = vpop.f32.mrb[0].mxu0
        %1250 = vmatprep.mubr.bf16.mxu0 0
        %1251 = vmatmul.mubr.bf16.gmra.mrb[0].mxu0 %v1117
        %v1252 = vpop.f32.mrb[0].mxu0
        %v1253 = vadd.f32 0.0, %v1252
        %v1254 = vpop.f32.mrb[0].mxu0
        %v1255 = vpop.f32.mrb[0].mxu0
        %v1256 = vadd.f32 0.0, %v1255
        %v1257 = vpop.f32.mrb[0].mxu0
        %1258 = vmatprep.mubr.bf16.mxu0 0
        %1259 = vmatmul.mubr.bf16.gmra.mrb[0].mxu0 %v1118
        %v1260 = vpop.f32.mrb[0].mxu0
        %v1261 = vadd.f32 0.0, %v1260
        %v1262 = vpop.f32.mrb[0].mxu0
        %v1263 = vpop.f32.mrb[0].mxu0
        %v1264 = vadd.f32 0.0, %v1263
        %v1265 = vpop.f32.mrb[0].mxu0
        %1266 = vmatprep.mubr.bf16.mxu0 0
        %1267 = vmatmul.mubr.bf16.gmra.mrb[0].mxu0 %v1119
        %v1268 = vpop.f32.mrb[0].mxu0
        %v1269 = vadd.f32 0.0, %v1268
        %v1270 = vpop.f32.mrb[0].mxu0
        %v1271 = vpop.f32.mrb[0].mxu0
        %v1272 = vadd.f32 0.0, %v1271
        %v1273 = vpop.f32.mrb[0].mxu0
        %1274 = vmatprep.mubr.bf16.mxu0 0
        %1275 = vmatmul.mubr.bf16.gmra.mrb[0].mxu0 %v1120
        %v1276 = vpop.f32.mrb[0].mxu0
        %v1277 = vadd.f32 0.0, %v1276
        %v1278 = vpop.f32.mrb[0].mxu0
        %v1279 = vpop.f32.mrb[0].mxu0
        %v1280 = vadd.f32 0.0, %v1279
        %v1281 = vpop.f32.mrb[0].mxu0
        %1282 = vmatprep.mubr.bf16.mxu0 0
        %1283 = vmatmul.mubr.bf16.gmra.mrb[0].mxu0 %v1121
        %v1284 = vpop.f32.mrb[0].mxu0
        %v1285 = vadd.f32 0.0, %v1284
        %v1286 = vpop.f32.mrb[0].mxu0
        %v1287 = vpop.f32.mrb[0].mxu0
        %v1288 = vadd.f32 0.0, %v1287
        %v1289 = vpop.f32.mrb[0].mxu0
        %1290 = vmatprep.mubr.bf16.mxu0 0
        %1291 = vmatmul.mubr.bf16.gmra.mrb[0].mxu0 %v1122
        %v1292 = vpop.f32.mrb[0].mxu0
        %v1293 = vadd.f32 0.0, %v1292
        %v1294 = vpop.f32.mrb[0].mxu0
        %v1295 = vpop.f32.mrb[0].mxu0
        %v1296 = vadd.f32 0.0, %v1295
        %v1297 = vpop.f32.mrb[0].mxu0
        %1298 = vmatprep.mubr.bf16.mxu0 0
        %1299 = vmatmul.mubr.bf16.gmra.mrb[0].mxu0 %v1123
        %v1300 = vpop.f32.mrb[0].mxu0
        %v1301 = vadd.f32 0.0, %v1300
        %v1302 = vpop.f32.mrb[0].mxu0
        %v1303 = vpop.f32.mrb[0].mxu0
        %v1304 = vadd.f32 0.0, %v1303
        %v1305 = vpop.f32.mrb[0].mxu0
        %1306 = vmatprep.mubr.bf16.mxu0 0
        %1307 = vmatmul.mubr.bf16.gmra.mrb[0].mxu0 %v1124
        %v1308 = vpop.f32.mrb[0].mxu0
        %v1309 = vadd.f32 0.0, %v1308
        %v1310 = vpop.f32.mrb[0].mxu0
        %v1311 = vpop.f32.mrb[0].mxu0
        %v1312 = vadd.f32 0.0, %v1311
        %v1313 = vpop.f32.mrb[0].mxu0
        %1314 = vmatprep.mubr.bf16.mxu0 0
        %1315 = vmatmul.mubr.bf16.gmra.mrb[0].mxu0 %v1125
        %v1316 = vpop.f32.mrb[0].mxu0
        %v1317 = vadd.f32 0.0, %v1316
        %v1318 = vpop.f32.mrb[0].mxu0
        %v1319 = vpop.f32.mrb[0].mxu0
        %v1320 = vadd.f32 0.0, %v1319
        %v1321 = vpop.f32.mrb[0].mxu0
        %1322 = vmatprep.mubr.bf16.mxu0 0
        %1323 = vmatmul.mubr.bf16.gmra.mrb[0].mxu0 %v1126
        %v1324 = vpop.f32.mrb[0].mxu0
        %v1325 = vadd.f32 0.0, %v1324
        %v1326 = vpop.f32.mrb[0].mxu0
        %v1327 = vpop.f32.mrb[0].mxu0
        %v1328 = vadd.f32 0.0, %v1327
        %v1329 = vpop.f32.mrb[0].mxu0
        %1330 = vmatprep.mubr.bf16.mxu0 0
        %1331 = vmatmul.mubr.bf16.gmra.mrb[0].mxu0 %v1127
        %v1332 = vpop.f32.mrb[0].mxu0
        %v1333 = vadd.f32 0.0, %v1332
        %v1334 = vpop.f32.mrb[0].mxu0
        %v1335 = vpop.f32.mrb[0].mxu0
        %v1336 = vadd.f32 0.0, %v1335
        %v1337 = vpop.f32.mrb[0].mxu0
        %1338 = vmatprep.mubr.bf16.mxu0 0
        %1339 = vmatmul.mubr.bf16.gmra.mrb[0].mxu0 %v1128
        %v1340 = vpop.f32.mrb[0].mxu0
        %v1341 = vadd.f32 0.0, %v1340
        %v1342 = vpop.f32.mrb[0].mxu0
        %v1343 = vpop.f32.mrb[0].mxu0
        %v1344 = vadd.f32 0.0, %v1343
        %v1345 = vpop.f32.mrb[0].mxu0
        %1346 = vmatprep.mubr.bf16.mxu0 0
        %1347 = vmatmul.mubr.bf16.gmra.mrb[0].mxu0 %v1129
        %v1348 = vpop.f32.mrb[0].mxu0
        %v1349 = vadd.f32 0.0, %v1348
        %v1350 = vpop.f32.mrb[0].mxu0
        %v1351 = vpop.f32.mrb[0].mxu0
        %v1352 = vadd.f32 0.0, %v1351
        %v1353 = vpop.f32.mrb[0].mxu0
        %1354 = vdwg.mxu0
        %v1355 = vadd.f32 %v874, %v1229
        %v1356 = vadd.f32 %v877, %v1232
        %v1357 = vadd.f32 %v882, %v1237
        %v1358 = vadd.f32 %v885, %v1240
        %v1359 = vadd.f32 %v890, %v1245
        %v1360 = vadd.f32 %v893, %v1248
        %v1361 = vadd.f32 %v898, %v1253
        %v1362 = vadd.f32 %v901, %v1256
        %v1363 = vadd.f32 %v906, %v1261
        %v1364 = vadd.f32 %v909, %v1264
        %v1365 = vadd.f32 %v914, %v1269
        %v1366 = vadd.f32 %v917, %v1272
        %v1367 = vadd.f32 %v922, %v1277
        %v1368 = vadd.f32 %v925, %v1280
        %v1369 = vadd.f32 %v930, %v1285
        %v1370 = vadd.f32 %v933, %v1288
        %v1371 = vadd.f32 %v938, %v1293
        %v1372 = vadd.f32 %v941, %v1296
        %v1373 = vadd.f32 %v946, %v1301
        %v1374 = vadd.f32 %v949, %v1304
        %v1375 = vadd.f32 %v954, %v1309
        %v1376 = vadd.f32 %v957, %v1312
        %v1377 = vadd.f32 %v962, %v1317
        %v1378 = vadd.f32 %v965, %v1320
        %v1379 = vadd.f32 %v970, %v1325
        %v1380 = vadd.f32 %v973, %v1328
        %v1381 = vadd.f32 %v978, %v1333
        %v1382 = vadd.f32 %v981, %v1336
        %v1383 = vadd.f32 %v986, %v1341
        %v1384 = vadd.f32 %v989, %v1344
        %v1385 = vadd.f32 %v994, %v1349
        %v1386 = vadd.f32 %v997, %v1352
        %v1387 = vld [vmem:[%s2] sm:$0x1]
        %v1389 = vlaneseq
        %v1390 = vshrl.u32 %v1389, 7
        %v1391 = vsub.s32 0, %v1390
        %v1392 = vrot.slane %v1387, %v1391
        %v1394 = vadd.f32 %v1355, %v1392
        %v1395 = vadd.f32 %v1356, %v1392
        %v1396 = vadd.f32 %v1357, %v1392
        %v1397 = vadd.f32 %v1358, %v1392
        %v1398 = vadd.f32 %v1359, %v1392
        %v1399 = vadd.f32 %v1360, %v1392
        %v1400 = vadd.f32 %v1361, %v1392
        %v1401 = vadd.f32 %v1362, %v1392
        %v1402 = vadd.f32 %v1363, %v1392
        %v1403 = vadd.f32 %v1364, %v1392
        %v1404 = vadd.f32 %v1365, %v1392
        %v1405 = vadd.f32 %v1366, %v1392
        %v1406 = vadd.f32 %v1367, %v1392
        %v1407 = vadd.f32 %v1368, %v1392
        %v1408 = vadd.f32 %v1369, %v1392
        %v1409 = vadd.f32 %v1370, %v1392
        %v1410 = vadd.f32 %v1371, %v1392
        %v1411 = vadd.f32 %v1372, %v1392
        %v1412 = vadd.f32 %v1373, %v1392
        %v1413 = vadd.f32 %v1374, %v1392
        %v1414 = vadd.f32 %v1375, %v1392
        %v1415 = vadd.f32 %v1376, %v1392
        %v1416 = vadd.f32 %v1377, %v1392
        %v1417 = vadd.f32 %v1378, %v1392
        %v1418 = vadd.f32 %v1379, %v1392
        %v1419 = vadd.f32 %v1380, %v1392
        %v1420 = vadd.f32 %v1381, %v1392
        %v1421 = vadd.f32 %v1382, %v1392
        %v1422 = vadd.f32 %v1383, %v1392
        %v1423 = vadd.f32 %v1384, %v1392
        %v1424 = vadd.f32 %v1385, %v1392
        %v1425 = vadd.f32 %v1386, %v1392
        %v1426 = vmax.f32 %v1394, 0.0
        %v1427 = vmax.f32 %v1395, 0.0
        %v1428 = vmax.f32 %v1396, 0.0
        %v1429 = vmax.f32 %v1397, 0.0
        %v1430 = vmax.f32 %v1398, 0.0
        %v1431 = vmax.f32 %v1399, 0.0
        %v1432 = vmax.f32 %v1400, 0.0
        %v1433 = vmax.f32 %v1401, 0.0
        %v1434 = vmax.f32 %v1402, 0.0
        %v1435 = vmax.f32 %v1403, 0.0
        %v1436 = vmax.f32 %v1404, 0.0
        %v1437 = vmax.f32 %v1405, 0.0
        %v1438 = vmax.f32 %v1406, 0.0
        %v1439 = vmax.f32 %v1407, 0.0
        %v1440 = vmax.f32 %v1408, 0.0
        %v1441 = vmax.f32 %v1409, 0.0
        %v1442 = vmax.f32 %v1410, 0.0
        %v1443 = vmax.f32 %v1411, 0.0
        %v1444 = vmax.f32 %v1412, 0.0
        %v1445 = vmax.f32 %v1413, 0.0
        %v1446 = vmax.f32 %v1414, 0.0
        %v1447 = vmax.f32 %v1415, 0.0
        %v1448 = vmax.f32 %v1416, 0.0
        %v1449 = vmax.f32 %v1417, 0.0
        %v1450 = vmax.f32 %v1418, 0.0
        %v1451 = vmax.f32 %v1419, 0.0
        %v1452 = vmax.f32 %v1420, 0.0
        %v1453 = vmax.f32 %v1421, 0.0
        %v1454 = vmax.f32 %v1422, 0.0
        %v1455 = vmax.f32 %v1423, 0.0
        %v1456 = vmax.f32 %v1424, 0.0
        %v1457 = vmax.f32 %v1425, 0.0
        %v1458 = vpack.c.bf16 %v1427, %v1426
        %v1459 = vpack.c.bf16 %v1429, %v1428
        %v1460 = vpack.c.bf16 %v1431, %v1430
        %v1461 = vpack.c.bf16 %v1433, %v1432
        %v1462 = vpack.c.bf16 %v1435, %v1434
        %v1463 = vpack.c.bf16 %v1437, %v1436
        %v1464 = vpack.c.bf16 %v1439, %v1438
        %v1465 = vpack.c.bf16 %v1441, %v1440
        %v1466 = vpack.c.bf16 %v1443, %v1442
        %v1467 = vpack.c.bf16 %v1445, %v1444
        %v1468 = vpack.c.bf16 %v1447, %v1446
        %v1469 = vpack.c.bf16 %v1449, %v1448
        %v1470 = vpack.c.bf16 %v1451, %v1450
        %v1471 = vpack.c.bf16 %v1453, %v1452
        %v1472 = vpack.c.bf16 %v1455, %v1454
        %v1473 = vpack.c.bf16 %v1457, %v1456
        %v1474 = vld [vmem:[#allocation7] sm:$0xf]
        %v1475 = vld [vmem:[#allocation7 + $0x4] sm:$0xf]
        %v1476 = vld [vmem:[#allocation7 + $0x8] sm:$0xf]
        %v1477 = vld [vmem:[#allocation7 + $0xc] sm:$0xf]
        %v1478 = vld [vmem:[#allocation7 + $0x10] sm:$0xf]
        %v1479 = vld [vmem:[#allocation7 + $0x14] sm:$0xf]
        %v1480 = vld [vmem:[#allocation7 + $0x18] sm:$0xf]
        %v1481 = vld [vmem:[#allocation7 + $0x1c] sm:$0xf]
        %v1482 = vld [vmem:[#allocation7 + $0x20] sm:$0xf]
        %v1483 = vld [vmem:[#allocation7 + $0x24] sm:$0xf]
        %v1484 = vld [vmem:[#allocation7 + $0x28] sm:$0xf]
        %v1485 = vld [vmem:[#allocation7 + $0x2c] sm:$0xf]
        %v1486 = vld [vmem:[#allocation7 + $0x30] sm:$0xf]
        %v1487 = vld [vmem:[#allocation7 + $0x34] sm:$0xf]
        %v1488 = vld [vmem:[#allocation7 + $0x38] sm:$0xf]
        %v1489 = vld [vmem:[#allocation7 + $0x3c] sm:$0xf]
        %v1490 = vld [vmem:[%s4] sm:$0x1]
        %v1492 = vlaneseq
        %v1493 = vshrl.u32 %v1492, 7
        %v1494 = vsub.s32 0, %v1493
        %v1495 = vrot.slane %v1490, %v1494
        %v1513 = vunpack.c.l.b16 %v1474
        %v1514 = vunpack.c.l.b16 %v1475
        %v1515 = vunpack.c.l.b16 %v1476
        %v1516 = vunpack.c.l.b16 %v1477
        %v1517 = vunpack.c.l.b16 %v1478
        %v1518 = vunpack.c.l.b16 %v1479
        %v1519 = vunpack.c.l.b16 %v1480
        %v1520 = vunpack.c.l.b16 %v1481
        %v1521 = vunpack.c.l.b16 %v1482
        %v1522 = vunpack.c.l.b16 %v1483
        %v1523 = vunpack.c.l.b16 %v1484
        %v1524 = vunpack.c.l.b16 %v1485
        %v1525 = vunpack.c.l.b16 %v1486
        %v1526 = vunpack.c.l.b16 %v1487
        %v1527 = vunpack.c.l.b16 %v1488
        %v1528 = vunpack.c.l.b16 %v1489
        %v1529 = vpack.c.b16 %v1514, %v1513
        %v1530 = vpack.c.b16 %v1516, %v1515
        %v1531 = vpack.c.b16 %v1518, %v1517
        %v1532 = vpack.c.b16 %v1520, %v1519
        %v1533 = vpack.c.b16 %v1522, %v1521
        %v1534 = vpack.c.b16 %v1524, %v1523
        %v1535 = vpack.c.b16 %v1526, %v1525
        %v1536 = vpack.c.b16 %v1528, %v1527
        %1545 = vmatprep.subr.bf16.mxu0 0
        %1546 = vmatpush1.bf16.msra.mxu0 %v1529
        %1547 = vmatprep.subr.bf16.mxu0 0
        %1548 = vmatpush1.bf16.msra.mxu0 %v1530
        %1549 = vmatprep.subr.bf16.mxu0 0
        %1550 = vmatpush1.bf16.msra.mxu0 %v1531
        %1551 = vmatprep.subr.bf16.mxu0 0
        %1552 = vmatpush1.bf16.msra.mxu0 %v1532
        %1553 = vmatprep.subr.bf16.mxu0 0
        %1554 = vmatpush1.bf16.msra.mxu0 %v1533
        %1555 = vmatprep.subr.bf16.mxu0 0
        %1556 = vmatpush1.bf16.msra.mxu0 %v1534
        %1557 = vmatprep.subr.bf16.mxu0 0
        %1558 = vmatpush1.bf16.msra.mxu0 %v1535
        %1559 = vmatprep.subr.bf16.mxu0 0
        %1560 = vmatpush1.bf16.msra.mxu0 %v1536
        %1561 = vmatprep.subr.bf16.mxu0 0
        %1562 = vmatpush1.bf16.msra.mxu0 0
        %1563 = vmatprep.subr.bf16.mxu0 0
        %1564 = vmatpush1.bf16.msra.mxu0 0
        %1565 = vmatprep.subr.bf16.mxu0 0
        %1566 = vmatpush1.bf16.msra.mxu0 0
        %1567 = vmatprep.subr.bf16.mxu0 0
        %1568 = vmatpush1.bf16.msra.mxu0 0
        %1569 = vmatprep.subr.bf16.mxu0 0
        %1570 = vmatpush1.bf16.msra.mxu0 0
        %1571 = vmatprep.subr.bf16.mxu0 0
        %1572 = vmatpush1.bf16.msra.mxu0 0
        %1573 = vmatprep.subr.bf16.mxu0 0
        %1574 = vmatpush1.bf16.msra.mxu0 0
        %1575 = vmatprep.subr.bf16.mxu0 0
        %1576 = vmatpush1.bf16.msra.mxu0 0
        %1577 = vmatprep.mubr.bf16.mxu0 0
        %1578 = vmatmul.mubr.bf16.gmra.mrb[0].mxu0 %v1458
        %v1579 = vpop.f32.mrb[0].mxu0
        %v1580 = vadd.f32 %v1495, %v1579
        %v1581 = vpop.f32.mrb[0].mxu0
        %v1582 = vpop.f32.mrb[0].mxu0
        %v1583 = vadd.f32 %v1495, %v1582
        %v1584 = vpop.f32.mrb[0].mxu0
        %1585 = vmatprep.mubr.bf16.mxu0 0
        %1586 = vmatmul.mubr.bf16.gmra.mrb[0].mxu0 %v1459
        %v1587 = vpop.f32.mrb[0].mxu0
        %v1588 = vadd.f32 %v1495, %v1587
        %v1589 = vpop.f32.mrb[0].mxu0
        %v1590 = vpop.f32.mrb[0].mxu0
        %v1591 = vadd.f32 %v1495, %v1590
        %v1592 = vpop.f32.mrb[0].mxu0
        %1593 = vmatprep.mubr.bf16.mxu0 0
        %1594 = vmatmul.mubr.bf16.gmra.mrb[0].mxu0 %v1460
        %v1595 = vpop.f32.mrb[0].mxu0
        %v1596 = vadd.f32 %v1495, %v1595
        %v1597 = vpop.f32.mrb[0].mxu0
        %v1598 = vpop.f32.mrb[0].mxu0
        %v1599 = vadd.f32 %v1495, %v1598
        %v1600 = vpop.f32.mrb[0].mxu0
        %1601 = vmatprep.mubr.bf16.mxu0 0
        %1602 = vmatmul.mubr.bf16.gmra.mrb[0].mxu0 %v1461
        %v1603 = vpop.f32.mrb[0].mxu0
        %v1604 = vadd.f32 %v1495, %v1603
        %v1605 = vpop.f32.mrb[0].mxu0
        %v1606 = vpop.f32.mrb[0].mxu0
        %v1607 = vadd.f32 %v1495, %v1606
        %v1608 = vpop.f32.mrb[0].mxu0
        %1609 = vmatprep.mubr.bf16.mxu0 0
        %1610 = vmatmul.mubr.bf16.gmra.mrb[0].mxu0 %v1462
        %v1611 = vpop.f32.mrb[0].mxu0
        %v1612 = vadd.f32 %v1495, %v1611
        %v1613 = vpop.f32.mrb[0].mxu0
        %v1614 = vpop.f32.mrb[0].mxu0
        %v1615 = vadd.f32 %v1495, %v1614
        %v1616 = vpop.f32.mrb[0].mxu0
        %1617 = vmatprep.mubr.bf16.mxu0 0
        %1618 = vmatmul.mubr.bf16.gmra.mrb[0].mxu0 %v1463
        %v1619 = vpop.f32.mrb[0].mxu0
        %v1620 = vadd.f32 %v1495, %v1619
        %v1621 = vpop.f32.mrb[0].mxu0
        %v1622 = vpop.f32.mrb[0].mxu0
        %v1623 = vadd.f32 %v1495, %v1622
        %v1624 = vpop.f32.mrb[0].mxu0
        %1625 = vmatprep.mubr.bf16.mxu0 0
        %1626 = vmatmul.mubr.bf16.gmra.mrb[0].mxu0 %v1464
        %v1627 = vpop.f32.mrb[0].mxu0
        %v1628 = vadd.f32 %v1495, %v1627
        %v1629 = vpop.f32.mrb[0].mxu0
        %v1630 = vpop.f32.mrb[0].mxu0
        %v1631 = vadd.f32 %v1495, %v1630
        %v1632 = vpop.f32.mrb[0].mxu0
        %1633 = vmatprep.mubr.bf16.mxu0 0
        %1634 = vmatmul.mubr.bf16.gmra.mrb[0].mxu0 %v1465
        %v1635 = vpop.f32.mrb[0].mxu0
        %v1636 = vadd.f32 %v1495, %v1635
        %v1637 = vpop.f32.mrb[0].mxu0
        %v1638 = vpop.f32.mrb[0].mxu0
        %v1639 = vadd.f32 %v1495, %v1638
        %v1640 = vpop.f32.mrb[0].mxu0
        %1641 = vmatprep.mubr.bf16.mxu0 0
        %1642 = vmatmul.mubr.bf16.gmra.mrb[0].mxu0 %v1466
        %v1643 = vpop.f32.mrb[0].mxu0
        %v1644 = vadd.f32 %v1495, %v1643
        %v1645 = vpop.f32.mrb[0].mxu0
        %v1646 = vpop.f32.mrb[0].mxu0
        %v1647 = vadd.f32 %v1495, %v1646
        %v1648 = vpop.f32.mrb[0].mxu0
        %1649 = vmatprep.mubr.bf16.mxu0 0
        %1650 = vmatmul.mubr.bf16.gmra.mrb[0].mxu0 %v1467
        %v1651 = vpop.f32.mrb[0].mxu0
        %v1652 = vadd.f32 %v1495, %v1651
        %v1653 = vpop.f32.mrb[0].mxu0
        %v1654 = vpop.f32.mrb[0].mxu0
        %v1655 = vadd.f32 %v1495, %v1654
        %v1656 = vpop.f32.mrb[0].mxu0
        %1657 = vmatprep.mubr.bf16.mxu0 0
        %1658 = vmatmul.mubr.bf16.gmra.mrb[0].mxu0 %v1468
        %v1659 = vpop.f32.mrb[0].mxu0
        %v1660 = vadd.f32 %v1495, %v1659
        %v1661 = vpop.f32.mrb[0].mxu0
        %v1662 = vpop.f32.mrb[0].mxu0
        %v1663 = vadd.f32 %v1495, %v1662
        %v1664 = vpop.f32.mrb[0].mxu0
        %1665 = vmatprep.mubr.bf16.mxu0 0
        %1666 = vmatmul.mubr.bf16.gmra.mrb[0].mxu0 %v1469
        %v1667 = vpop.f32.mrb[0].mxu0
        %v1668 = vadd.f32 %v1495, %v1667
        %v1669 = vpop.f32.mrb[0].mxu0
        %v1670 = vpop.f32.mrb[0].mxu0
        %v1671 = vadd.f32 %v1495, %v1670
        %v1672 = vpop.f32.mrb[0].mxu0
        %1673 = vmatprep.mubr.bf16.mxu0 0
        %1674 = vmatmul.mubr.bf16.gmra.mrb[0].mxu0 %v1470
        %v1675 = vpop.f32.mrb[0].mxu0
        %v1676 = vadd.f32 %v1495, %v1675
        %v1677 = vpop.f32.mrb[0].mxu0
        %v1678 = vpop.f32.mrb[0].mxu0
        %v1679 = vadd.f32 %v1495, %v1678
        %v1680 = vpop.f32.mrb[0].mxu0
        %1681 = vmatprep.mubr.bf16.mxu0 0
        %1682 = vmatmul.mubr.bf16.gmra.mrb[0].mxu0 %v1471
        %v1683 = vpop.f32.mrb[0].mxu0
        %v1684 = vadd.f32 %v1495, %v1683
        %v1685 = vpop.f32.mrb[0].mxu0
        %v1686 = vpop.f32.mrb[0].mxu0
        %v1687 = vadd.f32 %v1495, %v1686
        %v1688 = vpop.f32.mrb[0].mxu0
        %1689 = vmatprep.mubr.bf16.mxu0 0
        %1690 = vmatmul.mubr.bf16.gmra.mrb[0].mxu0 %v1472
        %v1691 = vpop.f32.mrb[0].mxu0
        %v1692 = vadd.f32 %v1495, %v1691
        %v1693 = vpop.f32.mrb[0].mxu0
        %v1694 = vpop.f32.mrb[0].mxu0
        %v1695 = vadd.f32 %v1495, %v1694
        %v1696 = vpop.f32.mrb[0].mxu0
        %1697 = vmatprep.mubr.bf16.mxu0 0
        %1698 = vmatmul.mubr.bf16.gmra.mrb[0].mxu0 %v1473
        %v1699 = vpop.f32.mrb[0].mxu0
        %v1700 = vadd.f32 %v1495, %v1699
        %v1701 = vpop.f32.mrb[0].mxu0
        %v1702 = vpop.f32.mrb[0].mxu0
        %v1703 = vadd.f32 %v1495, %v1702
        %v1704 = vpop.f32.mrb[0].mxu0
        %1705 = vdwg.mxu0
        %1706 = vst [vmem:[%s289] sm:$0xff] %v1580
        %1707 = vst [vmem:[%s289 + $0x8] sm:$0xff] %v1583
        %1708 = vst [vmem:[%s289 + $0x10] sm:$0xff] %v1588
        %1709 = vst [vmem:[%s289 + $0x18] sm:$0xff] %v1591
        %1710 = vst [vmem:[%s289 + $0x20] sm:$0xff] %v1596
        %1711 = vst [vmem:[%s289 + $0x28] sm:$0xff] %v1599
        %1712 = vst [vmem:[%s289 + $0x30] sm:$0xff] %v1604
        %1713 = vst [vmem:[%s289 + $0x38] sm:$0xff] %v1607
        %1714 = vst [vmem:[%s289 + $0x40] sm:$0xff] %v1612
        %1715 = vst [vmem:[%s289 + $0x48] sm:$0xff] %v1615
        %1716 = vst [vmem:[%s289 + $0x50] sm:$0xff] %v1620
        %1717 = vst [vmem:[%s289 + $0x58] sm:$0xff] %v1623
        %1718 = vst [vmem:[%s289 + $0x60] sm:$0xff] %v1628
        %1719 = vst [vmem:[%s289 + $0x68] sm:$0xff] %v1631
        %1720 = vst [vmem:[%s289 + $0x70] sm:$0xff] %v1636
        %1721 = vst [vmem:[%s289 + $0x78] sm:$0xff] %v1639
        %1722 = vst [vmem:[%s289 + $0x80] sm:$0xff] %v1644
        %1723 = vst [vmem:[%s289 + $0x88] sm:$0xff] %v1647
        %1724 = vst [vmem:[%s289 + $0x90] sm:$0xff] %v1652
        %1725 = vst [vmem:[%s289 + $0x98] sm:$0xff] %v1655
        %1726 = vst [vmem:[%s289 + $0xa0] sm:$0xff] %v1660
        %1727 = vst [vmem:[%s289 + $0xa8] sm:$0xff] %v1663
        %1728 = vst [vmem:[%s289 + $0xb0] sm:$0xff] %v1668
        %1729 = vst [vmem:[%s289 + $0xb8] sm:$0xff] %v1671
        %1730 = vst [vmem:[%s289 + $0xc0] sm:$0xff] %v1676
        %1731 = vst [vmem:[%s289 + $0xc8] sm:$0xff] %v1679
        %1732 = vst [vmem:[%s289 + $0xd0] sm:$0xff] %v1684
        %1733 = vst [vmem:[%s289 + $0xd8] sm:$0xff] %v1687
        %1734 = vst [vmem:[%s289 + $0xe0] sm:$0xff] %v1692
        %1735 = vst [vmem:[%s289 + $0xe8] sm:$0xff] %v1695
        %1736 = vst [vmem:[%s289 + $0xf0] sm:$0xff] %v1700
        %1737 = vst [vmem:[%s289 + $0xf8] sm:$0xff] %v1703
        %s1738 = sand.u32 %s157, 1
        %s1739 = scalar_lea.sflag [#allocation4], %s1738
        %s1740 = sand.u32 %s157, 1
        %s1741 = smul.addr %s1740, 256
        %s1742 = scalar_lea.vmem [#allocation8], %s1741
        // Predicated region
        $region53: #{tpu_custom_call.1} parent=39 // pred_check
          %p1743 = pneg %p167
        $region54: #{tpu_custom_call.1} parent=39 // pred_check_branch
          %1745 = sbr.rel (%p1743) target = $region56
        $region55: #{tpu_custom_call.1} parent=39 // pred_region
          %s1746 = smul.u32 16, %s28
          %s1748 = ssub.s32 4096, 4096
          %1749 = vsyncadd %s1739, %s1748
          %s1750 = smul.addr %s1746, 2
          %s1751 = smul.addr %s27, 32
          %s1752 = sadd.s32 %s1750, %s1751
          %s1753 = smul.addr %s1752, 128
          %s1754 = scalar_lea.hbm %s5, %s1753
          %s1755 = sshll.u32 %s1742, 4
          %s1756 = int_to_ptr.vmem [resolvable:$true] %s1755
          %1761 = dma.vmem_to_hbm [thread:$0]  %s1756, 4096, %s1754, %s1739, 128, 128, 8
        $region56: #{tpu_custom_call.1} parent=39 // pred_fallthru
          _
      $region40: #{tpu_custom_call.1} parent=5 // pred_fallthru
        _
      %p1762 = scmp.le.s32.totalorder 2, %s18
      // Predicated region
      $region57: #{tpu_custom_call.1} parent=5 // pred_check
        %p1763 = pneg %p1762
      $region58: #{tpu_custom_call.1} parent=5 // pred_check_branch
        %1765 = sbr.rel (%p1763) target = $region60
      $region59: #{tpu_custom_call.1} parent=5 // pred_region
        %s1766 = ssub.s32 %s18, 2
        // Predicated region
        $region61: #{tpu_custom_call.1} parent=59 // pred_check
          %p1767 = pneg %p173
        $region62: #{tpu_custom_call.1} parent=59 // pred_check_branch
          %1769 = sbr.rel (%p1767) target = $region64
        $region63: #{tpu_custom_call.1} parent=59 // pred_region
          %s1770 = sand.u32 %s158, 1
          %s1771 = scalar_lea.sflag [#allocation4], %s1770
          %s1772 = sand.u32 %s158, 1
          %s1773 = smul.addr %s1772, 256
          %s1774 = scalar_lea.vmem [#allocation8], %s1773
          %1775 = dma.done %s1771, 4096
        $region64: #{tpu_custom_call.1} parent=59 // pred_fallthru
          _
      $region60: #{tpu_custom_call.1} parent=5 // pred_fallthru
        _
    $region6: #{tpu_custom_call.1} parent=1 // loop_footer
      %s22 = sadd.s32 1, %s18
    $region7: #{tpu_custom_call.1} parent=1 // loop_footer_branch
      %17 = sbr.rel target = $region3
    $region8: #{tpu_custom_call.1} parent=1 // loop_exit
      _
    %1776 = vsyncpa [#allocation3], 1
    %s1777 = scalar_lea.sflag [#allocation3], 1
    %1778 = vsyncpa %s1777, 1
    %1779 = vsyncpa [#allocation6], 1
    %1780 = vsyncpa [#allocation4], 1
    %s1781 = scalar_lea.sflag [#allocation4], 1
    %1782 = vsyncpa %s1781, 1

</llo_original>
